<compile_context>
chip_gen: v6e
topology: v6e:2x2x1
jax: 0.10.0
libtpu: 0.0.40
codegen_flags: <defaults>
</compile_context>

<pallas_src>
import functools

import jax
import jax.numpy as jnp
from jax import lax
from jax.experimental import pallas as pl
from jax.experimental.pallas import tpu as pltpu


def _round_up(x, m):
    return (x + m - 1) // m * m


def _tap_geometry(K, dil, Wp, Lout):
    """Static per-kh geometry for 128-aligned wide loads.

    For kernel row kh the flat tap offset is base = kh*dil*Wp.  The kernel loads a
    lane-aligned wide window starting at align128(base) and derives the K column
    taps from it with lane rolls of r = (base - align128(base)) + kw*dil.
    Returns ([(base_aligned, r0, extra_lanes)], required flat input length).
    """
    halo = (K - 1) * dil
    rows = []
    req = Lout
    for kh in range(K):
        base = kh * dil * Wp
        base_al = (base // 128) * 128
        r0 = base - base_al
        extra = _round_up(r0 + halo, 128) if (r0 + halo) else 0
        rows.append((base_al, r0, extra))
        req = max(req, base_al + Lout + extra)
    return rows, req


def _dwsep_basicblock_kernel(x_ref, wdw_ref, wpw_ref, shift_ref, o_ref,
                             *, C, O, K, dil, Lout, Lc, tap_rows):
    """Depthwise conv -> pointwise 1x1 (BN scale pre-folded) -> +shift -> ReLU.

    x_ref:     (C, Nb, L)    bf16 zero-padded, spatially-flattened images (VMEM)
    wdw_ref:   (C, K*K)      f32 depthwise taps                              (SMEM)
    wpw_ref:   (O, C)        f32 pointwise weights with BN scale folded in   (SMEM)
    shift_ref: (O,)          f32 BN shift (beta - mean*scale)                (SMEM)
    o_ref:     (O, Nb, Lout) f32 lane-dense flattened output (cropped outside)
    """
    KK = K * K
    # Hoist every scalar weight load out of all loops (cheap SMEM scalar reads;
    # avoids re-materializing broadcasts per iteration).
    wdw = [[wdw_ref[c, t] for t in range(KK)] for c in range(C)]
    wpw = [[wpw_ref[o, c] for c in range(C)] for o in range(O)]
    shift = [shift_ref[o] for o in range(O)]

    # Chunk the lane axis so the C per-channel f32 accumulators stay small; all
    # offsets are static Python ints -> every load start is 128-lane aligned and
    # every store is a full-lane (multiple-of-128) vst.
    n_chunks = -(-Lout // Lc)
    for ci in range(n_chunks):
        off = ci * Lc
        lc = min(Lc, Lout - off)

        # ---- depthwise: one aligned wide load per (c, kh); kw taps via XLU roll ----
        acc = []
        for c in range(C):
            a = None
            for kh in range(K):
                base_al, r0, extra = tap_rows[kh]
                w_wide = lc + extra
                start = base_al + off                      # multiple of 128
                wide = x_ref[c, :, start:start + w_wide].astype(jnp.float32)
                for kw in range(K):
                    r = r0 + kw * dil
                    if r == 0:
                        tap = wide[:, :lc]
                    else:
                        tap = pltpu.roll(wide, w_wide - r, 1)[:, :lc]
                    term = tap * wdw[c][kh * K + kw]
                    a = term if a is None else a + term
            acc.append(a)

        # ---- pointwise 1x1 (+ BN shift) + ReLU as VPU FMA chains (C, O tiny) ----
        # TODO(synk): for production channel counts (C, O >= 128) move this to the
        # MXU as one (O, C) @ (C, Nb*Lc) matmul with O/C tiled to 128/256 multiples.
        for o in range(O):
            y = acc[0] * wpw[o][0]
            for c in range(1, C):
                y = y + acc[c] * wpw[o][c]
            y = jnp.maximum(y + shift[o], 0.0)
            o_ref[o, :, off:off + lc] = y.astype(o_ref.dtype)


def _vmem_limit_bytes():
    cap = 64 * 1024 * 1024
    try:
        cap = int(getattr(pltpu.get_tpu_info(), "vmem_capacity_bytes", cap))
    except Exception:
        pass
    # ~96 MiB on v5e/v6e (128 MiB physical), ~48 MiB on v7x (64 MiB / TensorCore).
    return min(cap * 3 // 4, 112 * 1024 * 1024)


def _pick_batch_block(N, in_bytes_img, out_bytes_img, work_bytes_img, budget):
    # Second-to-last block dim must be a multiple of 8 or equal the full batch.
    cands = [nb for nb in range(1, N + 1)
             if N % nb == 0 and (nb == N or nb % 8 == 0)]

    def fits(nb):  # double-buffered in/out blocks + live working set + margin
        return 2 * nb * (in_bytes_img + out_bytes_img) + nb * work_bytes_img + (1 << 20) <= budget

    feasible = [nb for nb in cands if fits(nb)] or [min(cands)]
    # TODO(synk): if even the smallest block overflows VMEM, tile Lout/C across the
    # grid instead of relying on this fallback.

    def score(nb):
        steps = N // nb
        # Prefer >=4 grid steps (>=2 per v7x TensorCore), then >=2, then an even
        # step count (balanced megacore sharding), then the largest block.
        return (steps >= 4, steps >= 2, steps % 2 == 0, nb)

    return max(feasible, key=score)


def conv2d_dwsep_basicblock(x, w_dw, w_pw, gamma, beta, run_mean, run_var,
                            *, padding, dilation, eps=1e-5, lane_chunk=1024):
    """x: (N, C, H, W) float32.  Returns (N, O, Ho, Wo) float32."""
    N, C, H, W = x.shape
    O = w_pw.shape[0]
    K = w_dw.shape[-1]

    Hp, Wp = H + 2 * padding, W + 2 * padding
    eff = (K - 1) * dilation + 1
    Ho, Wo = Hp - eff + 1, Wp - eff + 1

    # Lane-dense flattened output width.  The Wp-Wo ghost columns per row plus the
    # 128-roundup tail are computed then cropped; this overhead amortizes away for
    # large W (double-digit % only for tiny images like this demo).
    Lout = _round_up(Ho * Wp, 128)
    Lc = min(lane_chunk, Lout)
    tap_rows, req = _tap_geometry(K, dilation, Wp, Lout)

    # ---- single HBM prep pass: one pad (spatial + extra zero rows covering the
    # flat tail) fused by XLA with the transpose / reshape / bf16 cast ----
    extra_rows = 0
    if req > Hp * Wp:
        extra_rows = -(-(req - Hp * Wp) // Wp)
    L = (Hp + extra_rows) * Wp
    x_p = jnp.pad(x, ((0, 0), (0, 0),
                      (padding, padding + extra_rows), (padding, padding)))
    x_flat = jnp.transpose(x_p, (1, 0, 2, 3)).reshape(C, N, L).astype(jnp.bfloat16)

    # Fold BN (inference) into the pointwise weights; only the shift stays in-kernel.
    scale = gamma * lax.rsqrt(run_var + eps)
    wpw_scaled = (scale[:, None] * w_pw.reshape(O, C)).astype(jnp.float32)
    shift = (beta - run_mean * scale).astype(jnp.float32)
    wdw_flat = w_dw.reshape(C, K * K).astype(jnp.float32)

    in_bytes_img = C * L * 2            # bf16 input block bytes per image
    out_bytes_img = O * Lout * 4        # f32 output block bytes per image
    work_bytes_img = 2 * C * Lc * 4     # live f32 accumulators + temporaries
    vmem_limit = _vmem_limit_bytes()
    Nb = _pick_batch_block(N, in_bytes_img, out_bytes_img, work_bytes_img, vmem_limit)

    kernel = functools.partial(
        _dwsep_basicblock_kernel,
        C=C, O=O, K=K, dil=dilation, Lout=Lout, Lc=Lc, tap_rows=tuple(tap_rows))

    out_flat = pl.pallas_call(
        kernel,
        out_shape=jax.ShapeDtypeStruct((O, N, Lout), jnp.float32),
        grid_spec=pltpu.PrefetchScalarGridSpec(
            num_scalar_prefetch=0,
            grid=(N // Nb,),
            in_specs=[
                pl.BlockSpec((C, Nb, L), lambda g: (0, g, 0)),
                pl.BlockSpec(memory_space=pltpu.MemorySpace.SMEM),   # wdw (C, K*K)
                pl.BlockSpec(memory_space=pltpu.MemorySpace.SMEM),   # wpw (O, C)
                pl.BlockSpec(memory_space=pltpu.MemorySpace.SMEM),   # shift (O,)
            ],
            out_specs=pl.BlockSpec((O, Nb, Lout), lambda g: (0, g, 0)),
        ),
        compiler_params=pltpu.CompilerParams(
            dimension_semantics=("parallel",),
            vmem_limit_bytes=vmem_limit,
        ),
    )(x_flat, wdw_flat, wpw_scaled, shift)

    # Un-flatten: drop the roundup tail and the ghost border columns, back to NCHW.
    # (Single fused slice/reshape/transpose copy; downstream ops could instead
    # consume the lane-dense (O, N, Lout) form directly.)
    out = out_flat[:, :, :Ho * Wp].reshape(O, N, Ho, Wp)[:, :, :, :Wo]
    return jnp.transpose(out, (1, 0, 2, 3))


def reference(x, w_dw, w_pw, gamma, beta, run_mean, run_var, *, padding, dilation, eps=1e-5):
    """Pure-JAX reference mirroring the PyTorch forward (eval mode)."""
    N, C, H, W = x.shape
    O = w_pw.shape[0]
    K = w_dw.shape[-1]
    dn = ("NCHW", "OIHW", "NCHW")
    hp = lax.Precision.HIGHEST
    dw = lax.conv_general_dilated(
        x, w_dw.reshape(C, 1, K, K), window_strides=(1, 1),
        padding=[(padding, padding), (padding, padding)],
        rhs_dilation=(dilation, dilation),
        feature_group_count=C, dimension_numbers=dn, precision=hp)
    pw = lax.conv_general_dilated(
        dw, w_pw.reshape(O, C, 1, 1), window_strides=(1, 1),
        padding=[(0, 0), (0, 0)], dimension_numbers=dn, precision=hp)
    g = gamma[None, :, None, None]
    b = beta[None, :, None, None]
    m = run_mean[None, :, None, None]
    v = run_var[None, :, None, None]
    y = (pw - m) / jnp.sqrt(v + eps) * g + b
    return jnp.maximum(y, 0.0)


if __name__ == "__main__":
    # Small shapes consistent with the module: NCHW input.
    N, C, O, H, W, K = 2, 4, 8, 16, 16, 3
    padding, dilation = 2, 2            # "same"-sized output with dilated 3x3
    # drop_val = 0.0 -> dropout branch not taken (matches default ctor / eval mode).

    key = jax.random.PRNGKey(0)
    kx, kdw, kpw, kg, kb, km, kv = jax.random.split(key, 7)

    x = jax.random.normal(kx, (N, C, H, W), dtype=jnp.float32)
    w_dw = 0.2 * jax.random.normal(kdw, (C, K, K), dtype=jnp.float32)   # (C,1,K,K) squeezed
    w_pw = 0.2 * jax.random.normal(kpw, (O, C), dtype=jnp.float32)      # (O,C,1,1) squeezed
    gamma = 1.0 + 0.1 * jax.random.normal(kg, (O,), dtype=jnp.float32)
    beta = 0.1 * jax.random.normal(kb, (O,), dtype=jnp.float32)
    run_mean = 0.1 * jax.random.normal(km, (O,), dtype=jnp.float32)
    run_var = jax.random.uniform(kv, (O,), dtype=jnp.float32, minval=0.5, maxval=1.5)

    out = conv2d_dwsep_basicblock(x, w_dw, w_pw, gamma, beta, run_mean, run_var,
                                  padding=padding, dilation=dilation)
    out = jax.block_until_ready(out)
    assert out.shape == (N, O, H, W), out.shape

    # Tight check against a reference fed the same bf16-quantized input: isolates
    # kernel math (all accumulation is f32, no MXU), so tolerance can be tight.
    x_q = x.astype(jnp.bfloat16).astype(jnp.float32)
    ref_q = reference(x_q, w_dw, w_pw, gamma, beta, run_mean, run_var,
                      padding=padding, dilation=dilation)
    err_q = float(jnp.max(jnp.abs(out - ref_q)))
    assert jnp.allclose(out, ref_q, atol=2e-3, rtol=2e-3), \
        f"max abs err vs bf16-quantized-input reference = {err_q}"

    # Loose check against the full-f32 PyTorch-equivalent reference; the only
    # intentional deviation is the bf16 input DMA path (inference-acceptable).
    ref = reference(x, w_dw, w_pw, gamma, beta, run_mean, run_var,
                    padding=padding, dilation=dilation)
    err = float(jnp.max(jnp.abs(out - ref)))
    assert jnp.allclose(out, ref, atol=5e-2, rtol=5e-2), \
        f"max abs err vs f32 reference = {err}"
    print("KERNEL_OK")
</pallas_src>

<mosaic_0001>
module attributes {stable_mosaic.version = 11 : i64} {
  func.func @_dwsep_basicblock_kernel(%arg0: i32, %arg1: memref<4x2x520xbf16, #tpu.memory_space<vmem>>, %arg2: memref<4x9xf32, #tpu.memory_space<smem>>, %arg3: memref<8x4xf32, #tpu.memory_space<smem>>, %arg4: memref<8xf32, #tpu.memory_space<smem>>, %arg5: memref<8x2x384xf32, #tpu.memory_space<vmem>>) attributes {dimension_semantics = [#tpu.dimension_semantics<parallel>], iteration_bounds = array<i64: 1>, scalar_prefetch = 0 : i64, scratch_operands = 0 : i64, tpu.core_type = #tpu.core_type<tc>, window_params = [{transform_indices = @transform_0, window_bounds = array<i64: 4, 2, 520>}, {transform_indices = @transform_1, window_bounds = array<i64: 4, 9>}, {transform_indices = @transform_2, window_bounds = array<i64: 8, 4>}, {transform_indices = @transform_3, window_bounds = array<i64: 8>}, {transform_indices = @transform_4, window_bounds = array<i64: 8, 2, 384>}]} {
    %c0 = arith.constant 0 : index
    %c0_0 = arith.constant 0 : index
    %0 = memref.load %arg2[%c0, %c0_0] : memref<4x9xf32, #tpu.memory_space<smem>>
    %c0_1 = arith.constant 0 : index
    %c1 = arith.constant 1 : index
    %1 = memref.load %arg2[%c0_1, %c1] : memref<4x9xf32, #tpu.memory_space<smem>>
    %c0_2 = arith.constant 0 : index
    %c2 = arith.constant 2 : index
    %2 = memref.load %arg2[%c0_2, %c2] : memref<4x9xf32, #tpu.memory_space<smem>>
    %c0_3 = arith.constant 0 : index
    %c3 = arith.constant 3 : index
    %3 = memref.load %arg2[%c0_3, %c3] : memref<4x9xf32, #tpu.memory_space<smem>>
    %c0_4 = arith.constant 0 : index
    %c4 = arith.constant 4 : index
    %4 = memref.load %arg2[%c0_4, %c4] : memref<4x9xf32, #tpu.memory_space<smem>>
    %c0_5 = arith.constant 0 : index
    %c5 = arith.constant 5 : index
    %5 = memref.load %arg2[%c0_5, %c5] : memref<4x9xf32, #tpu.memory_space<smem>>
    %c0_6 = arith.constant 0 : index
    %c6 = arith.constant 6 : index
    %6 = memref.load %arg2[%c0_6, %c6] : memref<4x9xf32, #tpu.memory_space<smem>>
    %c0_7 = arith.constant 0 : index
    %c7 = arith.constant 7 : index
    %7 = memref.load %arg2[%c0_7, %c7] : memref<4x9xf32, #tpu.memory_space<smem>>
    %c0_8 = arith.constant 0 : index
    %c8 = arith.constant 8 : index
    %8 = memref.load %arg2[%c0_8, %c8] : memref<4x9xf32, #tpu.memory_space<smem>>
    %c1_9 = arith.constant 1 : index
    %c0_10 = arith.constant 0 : index
    %9 = memref.load %arg2[%c1_9, %c0_10] : memref<4x9xf32, #tpu.memory_space<smem>>
    %c1_11 = arith.constant 1 : index
    %c1_12 = arith.constant 1 : index
    %10 = memref.load %arg2[%c1_11, %c1_12] : memref<4x9xf32, #tpu.memory_space<smem>>
    %c1_13 = arith.constant 1 : index
    %c2_14 = arith.constant 2 : index
    %11 = memref.load %arg2[%c1_13, %c2_14] : memref<4x9xf32, #tpu.memory_space<smem>>
    %c1_15 = arith.constant 1 : index
    %c3_16 = arith.constant 3 : index
    %12 = memref.load %arg2[%c1_15, %c3_16] : memref<4x9xf32, #tpu.memory_space<smem>>
    %c1_17 = arith.constant 1 : index
    %c4_18 = arith.constant 4 : index
    %13 = memref.load %arg2[%c1_17, %c4_18] : memref<4x9xf32, #tpu.memory_space<smem>>
    %c1_19 = arith.constant 1 : index
    %c5_20 = arith.constant 5 : index
    %14 = memref.load %arg2[%c1_19, %c5_20] : memref<4x9xf32, #tpu.memory_space<smem>>
    %c1_21 = arith.constant 1 : index
    %c6_22 = arith.constant 6 : index
    %15 = memref.load %arg2[%c1_21, %c6_22] : memref<4x9xf32, #tpu.memory_space<smem>>
    %c1_23 = arith.constant 1 : index
    %c7_24 = arith.constant 7 : index
    %16 = memref.load %arg2[%c1_23, %c7_24] : memref<4x9xf32, #tpu.memory_space<smem>>
    %c1_25 = arith.constant 1 : index
    %c8_26 = arith.constant 8 : index
    %17 = memref.load %arg2[%c1_25, %c8_26] : memref<4x9xf32, #tpu.memory_space<smem>>
    %c2_27 = arith.constant 2 : index
    %c0_28 = arith.constant 0 : index
    %18 = memref.load %arg2[%c2_27, %c0_28] : memref<4x9xf32, #tpu.memory_space<smem>>
    %c2_29 = arith.constant 2 : index
    %c1_30 = arith.constant 1 : index
    %19 = memref.load %arg2[%c2_29, %c1_30] : memref<4x9xf32, #tpu.memory_space<smem>>
    %c2_31 = arith.constant 2 : index
    %c2_32 = arith.constant 2 : index
    %20 = memref.load %arg2[%c2_31, %c2_32] : memref<4x9xf32, #tpu.memory_space<smem>>
    %c2_33 = arith.constant 2 : index
    %c3_34 = arith.constant 3 : index
    %21 = memref.load %arg2[%c2_33, %c3_34] : memref<4x9xf32, #tpu.memory_space<smem>>
    %c2_35 = arith.constant 2 : index
    %c4_36 = arith.constant 4 : index
    %22 = memref.load %arg2[%c2_35, %c4_36] : memref<4x9xf32, #tpu.memory_space<smem>>
    %c2_37 = arith.constant 2 : index
    %c5_38 = arith.constant 5 : index
    %23 = memref.load %arg2[%c2_37, %c5_38] : memref<4x9xf32, #tpu.memory_space<smem>>
    %c2_39 = arith.constant 2 : index
    %c6_40 = arith.constant 6 : index
    %24 = memref.load %arg2[%c2_39, %c6_40] : memref<4x9xf32, #tpu.memory_space<smem>>
    %c2_41 = arith.constant 2 : index
    %c7_42 = arith.constant 7 : index
    %25 = memref.load %arg2[%c2_41, %c7_42] : memref<4x9xf32, #tpu.memory_space<smem>>
    %c2_43 = arith.constant 2 : index
    %c8_44 = arith.constant 8 : index
    %26 = memref.load %arg2[%c2_43, %c8_44] : memref<4x9xf32, #tpu.memory_space<smem>>
    %c3_45 = arith.constant 3 : index
    %c0_46 = arith.constant 0 : index
    %27 = memref.load %arg2[%c3_45, %c0_46] : memref<4x9xf32, #tpu.memory_space<smem>>
    %c3_47 = arith.constant 3 : index
    %c1_48 = arith.constant 1 : index
    %28 = memref.load %arg2[%c3_47, %c1_48] : memref<4x9xf32, #tpu.memory_space<smem>>
    %c3_49 = arith.constant 3 : index
    %c2_50 = arith.constant 2 : index
    %29 = memref.load %arg2[%c3_49, %c2_50] : memref<4x9xf32, #tpu.memory_space<smem>>
    %c3_51 = arith.constant 3 : index
    %c3_52 = arith.constant 3 : index
    %30 = memref.load %arg2[%c3_51, %c3_52] : memref<4x9xf32, #tpu.memory_space<smem>>
    %c3_53 = arith.constant 3 : index
    %c4_54 = arith.constant 4 : index
    %31 = memref.load %arg2[%c3_53, %c4_54] : memref<4x9xf32, #tpu.memory_space<smem>>
    %c3_55 = arith.constant 3 : index
    %c5_56 = arith.constant 5 : index
    %32 = memref.load %arg2[%c3_55, %c5_56] : memref<4x9xf32, #tpu.memory_space<smem>>
    %c3_57 = arith.constant 3 : index
    %c6_58 = arith.constant 6 : index
    %33 = memref.load %arg2[%c3_57, %c6_58] : memref<4x9xf32, #tpu.memory_space<smem>>
    %c3_59 = arith.constant 3 : index
    %c7_60 = arith.constant 7 : index
    %34 = memref.load %arg2[%c3_59, %c7_60] : memref<4x9xf32, #tpu.memory_space<smem>>
    %c3_61 = arith.constant 3 : index
    %c8_62 = arith.constant 8 : index
    %35 = memref.load %arg2[%c3_61, %c8_62] : memref<4x9xf32, #tpu.memory_space<smem>>
    %c0_63 = arith.constant 0 : index
    %c0_64 = arith.constant 0 : index
    %36 = memref.load %arg3[%c0_63, %c0_64] : memref<8x4xf32, #tpu.memory_space<smem>>
    %c0_65 = arith.constant 0 : index
    %c1_66 = arith.constant 1 : index
    %37 = memref.load %arg3[%c0_65, %c1_66] : memref<8x4xf32, #tpu.memory_space<smem>>
    %c0_67 = arith.constant 0 : index
    %c2_68 = arith.constant 2 : index
    %38 = memref.load %arg3[%c0_67, %c2_68] : memref<8x4xf32, #tpu.memory_space<smem>>
    %c0_69 = arith.constant 0 : index
    %c3_70 = arith.constant 3 : index
    %39 = memref.load %arg3[%c0_69, %c3_70] : memref<8x4xf32, #tpu.memory_space<smem>>
    %c1_71 = arith.constant 1 : index
    %c0_72 = arith.constant 0 : index
    %40 = memref.load %arg3[%c1_71, %c0_72] : memref<8x4xf32, #tpu.memory_space<smem>>
    %c1_73 = arith.constant 1 : index
    %c1_74 = arith.constant 1 : index
    %41 = memref.load %arg3[%c1_73, %c1_74] : memref<8x4xf32, #tpu.memory_space<smem>>
    %c1_75 = arith.constant 1 : index
    %c2_76 = arith.constant 2 : index
    %42 = memref.load %arg3[%c1_75, %c2_76] : memref<8x4xf32, #tpu.memory_space<smem>>
    %c1_77 = arith.constant 1 : index
    %c3_78 = arith.constant 3 : index
    %43 = memref.load %arg3[%c1_77, %c3_78] : memref<8x4xf32, #tpu.memory_space<smem>>
    %c2_79 = arith.constant 2 : index
    %c0_80 = arith.constant 0 : index
    %44 = memref.load %arg3[%c2_79, %c0_80] : memref<8x4xf32, #tpu.memory_space<smem>>
    %c2_81 = arith.constant 2 : index
    %c1_82 = arith.constant 1 : index
    %45 = memref.load %arg3[%c2_81, %c1_82] : memref<8x4xf32, #tpu.memory_space<smem>>
    %c2_83 = arith.constant 2 : index
    %c2_84 = arith.constant 2 : index
    %46 = memref.load %arg3[%c2_83, %c2_84] : memref<8x4xf32, #tpu.memory_space<smem>>
    %c2_85 = arith.constant 2 : index
    %c3_86 = arith.constant 3 : index
    %47 = memref.load %arg3[%c2_85, %c3_86] : memref<8x4xf32, #tpu.memory_space<smem>>
    %c3_87 = arith.constant 3 : index
    %c0_88 = arith.constant 0 : index
    %48 = memref.load %arg3[%c3_87, %c0_88] : memref<8x4xf32, #tpu.memory_space<smem>>
    %c3_89 = arith.constant 3 : index
    %c1_90 = arith.constant 1 : index
    %49 = memref.load %arg3[%c3_89, %c1_90] : memref<8x4xf32, #tpu.memory_space<smem>>
    %c3_91 = arith.constant 3 : index
    %c2_92 = arith.constant 2 : index
    %50 = memref.load %arg3[%c3_91, %c2_92] : memref<8x4xf32, #tpu.memory_space<smem>>
    %c3_93 = arith.constant 3 : index
    %c3_94 = arith.constant 3 : index
    %51 = memref.load %arg3[%c3_93, %c3_94] : memref<8x4xf32, #tpu.memory_space<smem>>
    %c4_95 = arith.constant 4 : index
    %c0_96 = arith.constant 0 : index
    %52 = memref.load %arg3[%c4_95, %c0_96] : memref<8x4xf32, #tpu.memory_space<smem>>
    %c4_97 = arith.constant 4 : index
    %c1_98 = arith.constant 1 : index
    %53 = memref.load %arg3[%c4_97, %c1_98] : memref<8x4xf32, #tpu.memory_space<smem>>
    %c4_99 = arith.constant 4 : index
    %c2_100 = arith.constant 2 : index
    %54 = memref.load %arg3[%c4_99, %c2_100] : memref<8x4xf32, #tpu.memory_space<smem>>
    %c4_101 = arith.constant 4 : index
    %c3_102 = arith.constant 3 : index
    %55 = memref.load %arg3[%c4_101, %c3_102] : memref<8x4xf32, #tpu.memory_space<smem>>
    %c5_103 = arith.constant 5 : index
    %c0_104 = arith.constant 0 : index
    %56 = memref.load %arg3[%c5_103, %c0_104] : memref<8x4xf32, #tpu.memory_space<smem>>
    %c5_105 = arith.constant 5 : index
    %c1_106 = arith.constant 1 : index
    %57 = memref.load %arg3[%c5_105, %c1_106] : memref<8x4xf32, #tpu.memory_space<smem>>
    %c5_107 = arith.constant 5 : index
    %c2_108 = arith.constant 2 : index
    %58 = memref.load %arg3[%c5_107, %c2_108] : memref<8x4xf32, #tpu.memory_space<smem>>
    %c5_109 = arith.constant 5 : index
    %c3_110 = arith.constant 3 : index
    %59 = memref.load %arg3[%c5_109, %c3_110] : memref<8x4xf32, #tpu.memory_space<smem>>
    %c6_111 = arith.constant 6 : index
    %c0_112 = arith.constant 0 : index
    %60 = memref.load %arg3[%c6_111, %c0_112] : memref<8x4xf32, #tpu.memory_space<smem>>
    %c6_113 = arith.constant 6 : index
    %c1_114 = arith.constant 1 : index
    %61 = memref.load %arg3[%c6_113, %c1_114] : memref<8x4xf32, #tpu.memory_space<smem>>
    %c6_115 = arith.constant 6 : index
    %c2_116 = arith.constant 2 : index
    %62 = memref.load %arg3[%c6_115, %c2_116] : memref<8x4xf32, #tpu.memory_space<smem>>
    %c6_117 = arith.constant 6 : index
    %c3_118 = arith.constant 3 : index
    %63 = memref.load %arg3[%c6_117, %c3_118] : memref<8x4xf32, #tpu.memory_space<smem>>
    %c7_119 = arith.constant 7 : index
    %c0_120 = arith.constant 0 : index
    %64 = memref.load %arg3[%c7_119, %c0_120] : memref<8x4xf32, #tpu.memory_space<smem>>
    %c7_121 = arith.constant 7 : index
    %c1_122 = arith.constant 1 : index
    %65 = memref.load %arg3[%c7_121, %c1_122] : memref<8x4xf32, #tpu.memory_space<smem>>
    %c7_123 = arith.constant 7 : index
    %c2_124 = arith.constant 2 : index
    %66 = memref.load %arg3[%c7_123, %c2_124] : memref<8x4xf32, #tpu.memory_space<smem>>
    %c7_125 = arith.constant 7 : index
    %c3_126 = arith.constant 3 : index
    %67 = memref.load %arg3[%c7_125, %c3_126] : memref<8x4xf32, #tpu.memory_space<smem>>
    %c0_127 = arith.constant 0 : index
    %68 = memref.load %arg4[%c0_127] : memref<8xf32, #tpu.memory_space<smem>>
    %c1_128 = arith.constant 1 : index
    %69 = memref.load %arg4[%c1_128] : memref<8xf32, #tpu.memory_space<smem>>
    %c2_129 = arith.constant 2 : index
    %70 = memref.load %arg4[%c2_129] : memref<8xf32, #tpu.memory_space<smem>>
    %c3_130 = arith.constant 3 : index
    %71 = memref.load %arg4[%c3_130] : memref<8xf32, #tpu.memory_space<smem>>
    %c4_131 = arith.constant 4 : index
    %72 = memref.load %arg4[%c4_131] : memref<8xf32, #tpu.memory_space<smem>>
    %c5_132 = arith.constant 5 : index
    %73 = memref.load %arg4[%c5_132] : memref<8xf32, #tpu.memory_space<smem>>
    %c6_133 = arith.constant 6 : index
    %74 = memref.load %arg4[%c6_133] : memref<8xf32, #tpu.memory_space<smem>>
    %c7_134 = arith.constant 7 : index
    %75 = memref.load %arg4[%c7_134] : memref<8xf32, #tpu.memory_space<smem>>
    %c0_135 = arith.constant 0 : index
    %c0_136 = arith.constant 0 : index
    %c0_137 = arith.constant 0 : index
    %76 = vector.load %arg1[%c0_135, %c0_136, %c0_137] : memref<4x2x520xbf16, #tpu.memory_space<vmem>>, vector<1x2x512xbf16>
    %77 = vector.shape_cast %76 : vector<1x2x512xbf16> to vector<2x512xbf16>
    %78 = arith.extf %77 : vector<2x512xbf16> to vector<2x512xf32>
    %79 = vector.extract_strided_slice %78 {offsets = [0, 0], sizes = [2, 384], strides = [1, 1]} : vector<2x512xf32> to vector<2x384xf32>
    %80 = vector.broadcast %0 : f32 to vector<2x384xf32>
    %81 = arith.mulf %79, %80 : vector<2x384xf32>
    %c510_i32 = arith.constant 510 : i32
    %82 = tpu.dynamic_rotate %78 by %c510_i32 dim 1 : vector<2x512xf32>, i32 -> vector<2x512xf32>
    %83 = vector.extract_strided_slice %82 {offsets = [0, 0], sizes = [2, 384], strides = [1, 1]} : vector<2x512xf32> to vector<2x384xf32>
    %84 = vector.broadcast %1 : f32 to vector<2x384xf32>
    %85 = arith.mulf %83, %84 : vector<2x384xf32>
    %86 = arith.addf %81, %85 : vector<2x384xf32>
    %c508_i32 = arith.constant 508 : i32
    %87 = tpu.dynamic_rotate %78 by %c508_i32 dim 1 : vector<2x512xf32>, i32 -> vector<2x512xf32>
    %88 = vector.extract_strided_slice %87 {offsets = [0, 0], sizes = [2, 384], strides = [1, 1]} : vector<2x512xf32> to vector<2x384xf32>
    %89 = vector.broadcast %2 : f32 to vector<2x384xf32>
    %90 = arith.mulf %88, %89 : vector<2x384xf32>
    %91 = arith.addf %86, %90 : vector<2x384xf32>
    %c0_138 = arith.constant 0 : index
    %c0_139 = arith.constant 0 : index
    %c0_140 = arith.constant 0 : index
    %92 = vector.load %arg1[%c0_138, %c0_139, %c0_140] : memref<4x2x520xbf16, #tpu.memory_space<vmem>>, vector<1x2x512xbf16>
    %93 = vector.shape_cast %92 : vector<1x2x512xbf16> to vector<2x512xbf16>
    %94 = arith.extf %93 : vector<2x512xbf16> to vector<2x512xf32>
    %c472_i32 = arith.constant 472 : i32
    %95 = tpu.dynamic_rotate %94 by %c472_i32 dim 1 : vector<2x512xf32>, i32 -> vector<2x512xf32>
    %96 = vector.extract_strided_slice %95 {offsets = [0, 0], sizes = [2, 384], strides = [1, 1]} : vector<2x512xf32> to vector<2x384xf32>
    %97 = vector.broadcast %3 : f32 to vector<2x384xf32>
    %98 = arith.mulf %96, %97 : vector<2x384xf32>
    %99 = arith.addf %91, %98 : vector<2x384xf32>
    %c470_i32 = arith.constant 470 : i32
    %100 = tpu.dynamic_rotate %94 by %c470_i32 dim 1 : vector<2x512xf32>, i32 -> vector<2x512xf32>
    %101 = vector.extract_strided_slice %100 {offsets = [0, 0], sizes = [2, 384], strides = [1, 1]} : vector<2x512xf32> to vector<2x384xf32>
    %102 = vector.broadcast %4 : f32 to vector<2x384xf32>
    %103 = arith.mulf %101, %102 : vector<2x384xf32>
    %104 = arith.addf %99, %103 : vector<2x384xf32>
    %c468_i32 = arith.constant 468 : i32
    %105 = tpu.dynamic_rotate %94 by %c468_i32 dim 1 : vector<2x512xf32>, i32 -> vector<2x512xf32>
    %106 = vector.extract_strided_slice %105 {offsets = [0, 0], sizes = [2, 384], strides = [1, 1]} : vector<2x512xf32> to vector<2x384xf32>
    %107 = vector.broadcast %5 : f32 to vector<2x384xf32>
    %108 = arith.mulf %106, %107 : vector<2x384xf32>
    %109 = arith.addf %104, %108 : vector<2x384xf32>
    %c0_141 = arith.constant 0 : index
    %c0_142 = arith.constant 0 : index
    %c0_143 = arith.constant 0 : index
    %110 = vector.load %arg1[%c0_141, %c0_142, %c0_143] : memref<4x2x520xbf16, #tpu.memory_space<vmem>>, vector<1x2x512xbf16>
    %111 = vector.shape_cast %110 : vector<1x2x512xbf16> to vector<2x512xbf16>
    %112 = arith.extf %111 : vector<2x512xbf16> to vector<2x512xf32>
    %c432_i32 = arith.constant 432 : i32
    %113 = tpu.dynamic_rotate %112 by %c432_i32 dim 1 : vector<2x512xf32>, i32 -> vector<2x512xf32>
    %114 = vector.extract_strided_slice %113 {offsets = [0, 0], sizes = [2, 384], strides = [1, 1]} : vector<2x512xf32> to vector<2x384xf32>
    %115 = vector.broadcast %6 : f32 to vector<2x384xf32>
    %116 = arith.mulf %114, %115 : vector<2x384xf32>
    %117 = arith.addf %109, %116 : vector<2x384xf32>
    %c430_i32 = arith.constant 430 : i32
    %118 = tpu.dynamic_rotate %112 by %c430_i32 dim 1 : vector<2x512xf32>, i32 -> vector<2x512xf32>
    %119 = vector.extract_strided_slice %118 {offsets = [0, 0], sizes = [2, 384], strides = [1, 1]} : vector<2x512xf32> to vector<2x384xf32>
    %120 = vector.broadcast %7 : f32 to vector<2x384xf32>
    %121 = arith.mulf %119, %120 : vector<2x384xf32>
    %122 = arith.addf %117, %121 : vector<2x384xf32>
    %c428_i32 = arith.constant 428 : i32
    %123 = tpu.dynamic_rotate %112 by %c428_i32 dim 1 : vector<2x512xf32>, i32 -> vector<2x512xf32>
    %124 = vector.extract_strided_slice %123 {offsets = [0, 0], sizes = [2, 384], strides = [1, 1]} : vector<2x512xf32> to vector<2x384xf32>
    %125 = vector.broadcast %8 : f32 to vector<2x384xf32>
    %126 = arith.mulf %124, %125 : vector<2x384xf32>
    %127 = arith.addf %122, %126 : vector<2x384xf32>
    %c1_144 = arith.constant 1 : index
    %c0_145 = arith.constant 0 : index
    %c0_146 = arith.constant 0 : index
    %128 = vector.load %arg1[%c1_144, %c0_145, %c0_146] : memref<4x2x520xbf16, #tpu.memory_space<vmem>>, vector<1x2x512xbf16>
    %129 = vector.shape_cast %128 : vector<1x2x512xbf16> to vector<2x512xbf16>
    %130 = arith.extf %129 : vector<2x512xbf16> to vector<2x512xf32>
    %131 = vector.extract_strided_slice %130 {offsets = [0, 0], sizes = [2, 384], strides = [1, 1]} : vector<2x512xf32> to vector<2x384xf32>
    %132 = vector.broadcast %9 : f32 to vector<2x384xf32>
    %133 = arith.mulf %131, %132 : vector<2x384xf32>
    %c510_i32_147 = arith.constant 510 : i32
    %134 = tpu.dynamic_rotate %130 by %c510_i32_147 dim 1 : vector<2x512xf32>, i32 -> vector<2x512xf32>
    %135 = vector.extract_strided_slice %134 {offsets = [0, 0], sizes = [2, 384], strides = [1, 1]} : vector<2x512xf32> to vector<2x384xf32>
    %136 = vector.broadcast %10 : f32 to vector<2x384xf32>
    %137 = arith.mulf %135, %136 : vector<2x384xf32>
    %138 = arith.addf %133, %137 : vector<2x384xf32>
    %c508_i32_148 = arith.constant 508 : i32
    %139 = tpu.dynamic_rotate %130 by %c508_i32_148 dim 1 : vector<2x512xf32>, i32 -> vector<2x512xf32>
    %140 = vector.extract_strided_slice %139 {offsets = [0, 0], sizes = [2, 384], strides = [1, 1]} : vector<2x512xf32> to vector<2x384xf32>
    %141 = vector.broadcast %11 : f32 to vector<2x384xf32>
    %142 = arith.mulf %140, %141 : vector<2x384xf32>
    %143 = arith.addf %138, %142 : vector<2x384xf32>
    %c1_149 = arith.constant 1 : index
    %c0_150 = arith.constant 0 : index
    %c0_151 = arith.constant 0 : index
    %144 = vector.load %arg1[%c1_149, %c0_150, %c0_151] : memref<4x2x520xbf16, #tpu.memory_space<vmem>>, vector<1x2x512xbf16>
    %145 = vector.shape_cast %144 : vector<1x2x512xbf16> to vector<2x512xbf16>
    %146 = arith.extf %145 : vector<2x512xbf16> to vector<2x512xf32>
    %c472_i32_152 = arith.constant 472 : i32
    %147 = tpu.dynamic_rotate %146 by %c472_i32_152 dim 1 : vector<2x512xf32>, i32 -> vector<2x512xf32>
    %148 = vector.extract_strided_slice %147 {offsets = [0, 0], sizes = [2, 384], strides = [1, 1]} : vector<2x512xf32> to vector<2x384xf32>
    %149 = vector.broadcast %12 : f32 to vector<2x384xf32>
    %150 = arith.mulf %148, %149 : vector<2x384xf32>
    %151 = arith.addf %143, %150 : vector<2x384xf32>
    %c470_i32_153 = arith.constant 470 : i32
    %152 = tpu.dynamic_rotate %146 by %c470_i32_153 dim 1 : vector<2x512xf32>, i32 -> vector<2x512xf32>
    %153 = vector.extract_strided_slice %152 {offsets = [0, 0], sizes = [2, 384], strides = [1, 1]} : vector<2x512xf32> to vector<2x384xf32>
    %154 = vector.broadcast %13 : f32 to vector<2x384xf32>
    %155 = arith.mulf %153, %154 : vector<2x384xf32>
    %156 = arith.addf %151, %155 : vector<2x384xf32>
    %c468_i32_154 = arith.constant 468 : i32
    %157 = tpu.dynamic_rotate %146 by %c468_i32_154 dim 1 : vector<2x512xf32>, i32 -> vector<2x512xf32>
    %158 = vector.extract_strided_slice %157 {offsets = [0, 0], sizes = [2, 384], strides = [1, 1]} : vector<2x512xf32> to vector<2x384xf32>
    %159 = vector.broadcast %14 : f32 to vector<2x384xf32>
    %160 = arith.mulf %158, %159 : vector<2x384xf32>
    %161 = arith.addf %156, %160 : vector<2x384xf32>
    %c1_155 = arith.constant 1 : index
    %c0_156 = arith.constant 0 : index
    %c0_157 = arith.constant 0 : index
    %162 = vector.load %arg1[%c1_155, %c0_156, %c0_157] : memref<4x2x520xbf16, #tpu.memory_space<vmem>>, vector<1x2x512xbf16>
    %163 = vector.shape_cast %162 : vector<1x2x512xbf16> to vector<2x512xbf16>
    %164 = arith.extf %163 : vector<2x512xbf16> to vector<2x512xf32>
    %c432_i32_158 = arith.constant 432 : i32
    %165 = tpu.dynamic_rotate %164 by %c432_i32_158 dim 1 : vector<2x512xf32>, i32 -> vector<2x512xf32>
    %166 = vector.extract_strided_slice %165 {offsets = [0, 0], sizes = [2, 384], strides = [1, 1]} : vector<2x512xf32> to vector<2x384xf32>
    %167 = vector.broadcast %15 : f32 to vector<2x384xf32>
    %168 = arith.mulf %166, %167 : vector<2x384xf32>
    %169 = arith.addf %161, %168 : vector<2x384xf32>
    %c430_i32_159 = arith.constant 430 : i32
    %170 = tpu.dynamic_rotate %164 by %c430_i32_159 dim 1 : vector<2x512xf32>, i32 -> vector<2x512xf32>
    %171 = vector.extract_strided_slice %170 {offsets = [0, 0], sizes = [2, 384], strides = [1, 1]} : vector<2x512xf32> to vector<2x384xf32>
    %172 = vector.broadcast %16 : f32 to vector<2x384xf32>
    %173 = arith.mulf %171, %172 : vector<2x384xf32>
    %174 = arith.addf %169, %173 : vector<2x384xf32>
    %c428_i32_160 = arith.constant 428 : i32
    %175 = tpu.dynamic_rotate %164 by %c428_i32_160 dim 1 : vector<2x512xf32>, i32 -> vector<2x512xf32>
    %176 = vector.extract_strided_slice %175 {offsets = [0, 0], sizes = [2, 384], strides = [1, 1]} : vector<2x512xf32> to vector<2x384xf32>
    %177 = vector.broadcast %17 : f32 to vector<2x384xf32>
    %178 = arith.mulf %176, %177 : vector<2x384xf32>
    %179 = arith.addf %174, %178 : vector<2x384xf32>
    %c2_161 = arith.constant 2 : index
    %c0_162 = arith.constant 0 : index
    %c0_163 = arith.constant 0 : index
    %180 = vector.load %arg1[%c2_161, %c0_162, %c0_163] : memref<4x2x520xbf16, #tpu.memory_space<vmem>>, vector<1x2x512xbf16>
    %181 = vector.shape_cast %180 : vector<1x2x512xbf16> to vector<2x512xbf16>
    %182 = arith.extf %181 : vector<2x512xbf16> to vector<2x512xf32>
    %183 = vector.extract_strided_slice %182 {offsets = [0, 0], sizes = [2, 384], strides = [1, 1]} : vector<2x512xf32> to vector<2x384xf32>
    %184 = vector.broadcast %18 : f32 to vector<2x384xf32>
    %185 = arith.mulf %183, %184 : vector<2x384xf32>
    %c510_i32_164 = arith.constant 510 : i32
    %186 = tpu.dynamic_rotate %182 by %c510_i32_164 dim 1 : vector<2x512xf32>, i32 -> vector<2x512xf32>
    %187 = vector.extract_strided_slice %186 {offsets = [0, 0], sizes = [2, 384], strides = [1, 1]} : vector<2x512xf32> to vector<2x384xf32>
    %188 = vector.broadcast %19 : f32 to vector<2x384xf32>
    %189 = arith.mulf %187, %188 : vector<2x384xf32>
    %190 = arith.addf %185, %189 : vector<2x384xf32>
    %c508_i32_165 = arith.constant 508 : i32
    %191 = tpu.dynamic_rotate %182 by %c508_i32_165 dim 1 : vector<2x512xf32>, i32 -> vector<2x512xf32>
    %192 = vector.extract_strided_slice %191 {offsets = [0, 0], sizes = [2, 384], strides = [1, 1]} : vector<2x512xf32> to vector<2x384xf32>
    %193 = vector.broadcast %20 : f32 to vector<2x384xf32>
    %194 = arith.mulf %192, %193 : vector<2x384xf32>
    %195 = arith.addf %190, %194 : vector<2x384xf32>
    %c2_166 = arith.constant 2 : index
    %c0_167 = arith.constant 0 : index
    %c0_168 = arith.constant 0 : index
    %196 = vector.load %arg1[%c2_166, %c0_167, %c0_168] : memref<4x2x520xbf16, #tpu.memory_space<vmem>>, vector<1x2x512xbf16>
    %197 = vector.shape_cast %196 : vector<1x2x512xbf16> to vector<2x512xbf16>
    %198 = arith.extf %197 : vector<2x512xbf16> to vector<2x512xf32>
    %c472_i32_169 = arith.constant 472 : i32
    %199 = tpu.dynamic_rotate %198 by %c472_i32_169 dim 1 : vector<2x512xf32>, i32 -> vector<2x512xf32>
    %200 = vector.extract_strided_slice %199 {offsets = [0, 0], sizes = [2, 384], strides = [1, 1]} : vector<2x512xf32> to vector<2x384xf32>
    %201 = vector.broadcast %21 : f32 to vector<2x384xf32>
    %202 = arith.mulf %200, %201 : vector<2x384xf32>
    %203 = arith.addf %195, %202 : vector<2x384xf32>
    %c470_i32_170 = arith.constant 470 : i32
    %204 = tpu.dynamic_rotate %198 by %c470_i32_170 dim 1 : vector<2x512xf32>, i32 -> vector<2x512xf32>
    %205 = vector.extract_strided_slice %204 {offsets = [0, 0], sizes = [2, 384], strides = [1, 1]} : vector<2x512xf32> to vector<2x384xf32>
    %206 = vector.broadcast %22 : f32 to vector<2x384xf32>
    %207 = arith.mulf %205, %206 : vector<2x384xf32>
    %208 = arith.addf %203, %207 : vector<2x384xf32>
    %c468_i32_171 = arith.constant 468 : i32
    %209 = tpu.dynamic_rotate %198 by %c468_i32_171 dim 1 : vector<2x512xf32>, i32 -> vector<2x512xf32>
    %210 = vector.extract_strided_slice %209 {offsets = [0, 0], sizes = [2, 384], strides = [1, 1]} : vector<2x512xf32> to vector<2x384xf32>
    %211 = vector.broadcast %23 : f32 to vector<2x384xf32>
    %212 = arith.mulf %210, %211 : vector<2x384xf32>
    %213 = arith.addf %208, %212 : vector<2x384xf32>
    %c2_172 = arith.constant 2 : index
    %c0_173 = arith.constant 0 : index
    %c0_174 = arith.constant 0 : index
    %214 = vector.load %arg1[%c2_172, %c0_173, %c0_174] : memref<4x2x520xbf16, #tpu.memory_space<vmem>>, vector<1x2x512xbf16>
    %215 = vector.shape_cast %214 : vector<1x2x512xbf16> to vector<2x512xbf16>
    %216 = arith.extf %215 : vector<2x512xbf16> to vector<2x512xf32>
    %c432_i32_175 = arith.constant 432 : i32
    %217 = tpu.dynamic_rotate %216 by %c432_i32_175 dim 1 : vector<2x512xf32>, i32 -> vector<2x512xf32>
    %218 = vector.extract_strided_slice %217 {offsets = [0, 0], sizes = [2, 384], strides = [1, 1]} : vector<2x512xf32> to vector<2x384xf32>
    %219 = vector.broadcast %24 : f32 to vector<2x384xf32>
    %220 = arith.mulf %218, %219 : vector<2x384xf32>
    %221 = arith.addf %213, %220 : vector<2x384xf32>
    %c430_i32_176 = arith.constant 430 : i32
    %222 = tpu.dynamic_rotate %216 by %c430_i32_176 dim 1 : vector<2x512xf32>, i32 -> vector<2x512xf32>
    %223 = vector.extract_strided_slice %222 {offsets = [0, 0], sizes = [2, 384], strides = [1, 1]} : vector<2x512xf32> to vector<2x384xf32>
    %224 = vector.broadcast %25 : f32 to vector<2x384xf32>
    %225 = arith.mulf %223, %224 : vector<2x384xf32>
    %226 = arith.addf %221, %225 : vector<2x384xf32>
    %c428_i32_177 = arith.constant 428 : i32
    %227 = tpu.dynamic_rotate %216 by %c428_i32_177 dim 1 : vector<2x512xf32>, i32 -> vector<2x512xf32>
    %228 = vector.extract_strided_slice %227 {offsets = [0, 0], sizes = [2, 384], strides = [1, 1]} : vector<2x512xf32> to vector<2x384xf32>
    %229 = vector.broadcast %26 : f32 to vector<2x384xf32>
    %230 = arith.mulf %228, %229 : vector<2x384xf32>
    %231 = arith.addf %226, %230 : vector<2x384xf32>
    %c3_178 = arith.constant 3 : index
    %c0_179 = arith.constant 0 : index
    %c0_180 = arith.constant 0 : index
    %232 = vector.load %arg1[%c3_178, %c0_179, %c0_180] : memref<4x2x520xbf16, #tpu.memory_space<vmem>>, vector<1x2x512xbf16>
    %233 = vector.shape_cast %232 : vector<1x2x512xbf16> to vector<2x512xbf16>
    %234 = arith.extf %233 : vector<2x512xbf16> to vector<2x512xf32>
    %235 = vector.extract_strided_slice %234 {offsets = [0, 0], sizes = [2, 384], strides = [1, 1]} : vector<2x512xf32> to vector<2x384xf32>
    %236 = vector.broadcast %27 : f32 to vector<2x384xf32>
    %237 = arith.mulf %235, %236 : vector<2x384xf32>
    %c510_i32_181 = arith.constant 510 : i32
    %238 = tpu.dynamic_rotate %234 by %c510_i32_181 dim 1 : vector<2x512xf32>, i32 -> vector<2x512xf32>
    %239 = vector.extract_strided_slice %238 {offsets = [0, 0], sizes = [2, 384], strides = [1, 1]} : vector<2x512xf32> to vector<2x384xf32>
    %240 = vector.broadcast %28 : f32 to vector<2x384xf32>
    %241 = arith.mulf %239, %240 : vector<2x384xf32>
    %242 = arith.addf %237, %241 : vector<2x384xf32>
    %c508_i32_182 = arith.constant 508 : i32
    %243 = tpu.dynamic_rotate %234 by %c508_i32_182 dim 1 : vector<2x512xf32>, i32 -> vector<2x512xf32>
    %244 = vector.extract_strided_slice %243 {offsets = [0, 0], sizes = [2, 384], strides = [1, 1]} : vector<2x512xf32> to vector<2x384xf32>
    %245 = vector.broadcast %29 : f32 to vector<2x384xf32>
    %246 = arith.mulf %244, %245 : vector<2x384xf32>
    %247 = arith.addf %242, %246 : vector<2x384xf32>
    %c3_183 = arith.constant 3 : index
    %c0_184 = arith.constant 0 : index
    %c0_185 = arith.constant 0 : index
    %248 = vector.load %arg1[%c3_183, %c0_184, %c0_185] : memref<4x2x520xbf16, #tpu.memory_space<vmem>>, vector<1x2x512xbf16>
    %249 = vector.shape_cast %248 : vector<1x2x512xbf16> to vector<2x512xbf16>
    %250 = arith.extf %249 : vector<2x512xbf16> to vector<2x512xf32>
    %c472_i32_186 = arith.constant 472 : i32
    %251 = tpu.dynamic_rotate %250 by %c472_i32_186 dim 1 : vector<2x512xf32>, i32 -> vector<2x512xf32>
    %252 = vector.extract_strided_slice %251 {offsets = [0, 0], sizes = [2, 384], strides = [1, 1]} : vector<2x512xf32> to vector<2x384xf32>
    %253 = vector.broadcast %30 : f32 to vector<2x384xf32>
    %254 = arith.mulf %252, %253 : vector<2x384xf32>
    %255 = arith.addf %247, %254 : vector<2x384xf32>
    %c470_i32_187 = arith.constant 470 : i32
    %256 = tpu.dynamic_rotate %250 by %c470_i32_187 dim 1 : vector<2x512xf32>, i32 -> vector<2x512xf32>
    %257 = vector.extract_strided_slice %256 {offsets = [0, 0], sizes = [2, 384], strides = [1, 1]} : vector<2x512xf32> to vector<2x384xf32>
    %258 = vector.broadcast %31 : f32 to vector<2x384xf32>
    %259 = arith.mulf %257, %258 : vector<2x384xf32>
    %260 = arith.addf %255, %259 : vector<2x384xf32>
    %c468_i32_188 = arith.constant 468 : i32
    %261 = tpu.dynamic_rotate %250 by %c468_i32_188 dim 1 : vector<2x512xf32>, i32 -> vector<2x512xf32>
    %262 = vector.extract_strided_slice %261 {offsets = [0, 0], sizes = [2, 384], strides = [1, 1]} : vector<2x512xf32> to vector<2x384xf32>
    %263 = vector.broadcast %32 : f32 to vector<2x384xf32>
    %264 = arith.mulf %262, %263 : vector<2x384xf32>
    %265 = arith.addf %260, %264 : vector<2x384xf32>
    %c3_189 = arith.constant 3 : index
    %c0_190 = arith.constant 0 : index
    %c0_191 = arith.constant 0 : index
    %266 = vector.load %arg1[%c3_189, %c0_190, %c0_191] : memref<4x2x520xbf16, #tpu.memory_space<vmem>>, vector<1x2x512xbf16>
    %267 = vector.shape_cast %266 : vector<1x2x512xbf16> to vector<2x512xbf16>
    %268 = arith.extf %267 : vector<2x512xbf16> to vector<2x512xf32>
    %c432_i32_192 = arith.constant 432 : i32
    %269 = tpu.dynamic_rotate %268 by %c432_i32_192 dim 1 : vector<2x512xf32>, i32 -> vector<2x512xf32>
    %270 = vector.extract_strided_slice %269 {offsets = [0, 0], sizes = [2, 384], strides = [1, 1]} : vector<2x512xf32> to vector<2x384xf32>
    %271 = vector.broadcast %33 : f32 to vector<2x384xf32>
    %272 = arith.mulf %270, %271 : vector<2x384xf32>
    %273 = arith.addf %265, %272 : vector<2x384xf32>
    %c430_i32_193 = arith.constant 430 : i32
    %274 = tpu.dynamic_rotate %268 by %c430_i32_193 dim 1 : vector<2x512xf32>, i32 -> vector<2x512xf32>
    %275 = vector.extract_strided_slice %274 {offsets = [0, 0], sizes = [2, 384], strides = [1, 1]} : vector<2x512xf32> to vector<2x384xf32>
    %276 = vector.broadcast %34 : f32 to vector<2x384xf32>
    %277 = arith.mulf %275, %276 : vector<2x384xf32>
    %278 = arith.addf %273, %277 : vector<2x384xf32>
    %c428_i32_194 = arith.constant 428 : i32
    %279 = tpu.dynamic_rotate %268 by %c428_i32_194 dim 1 : vector<2x512xf32>, i32 -> vector<2x512xf32>
    %280 = vector.extract_strided_slice %279 {offsets = [0, 0], sizes = [2, 384], strides = [1, 1]} : vector<2x512xf32> to vector<2x384xf32>
    %281 = vector.broadcast %35 : f32 to vector<2x384xf32>
    %282 = arith.mulf %280, %281 : vector<2x384xf32>
    %283 = arith.addf %278, %282 : vector<2x384xf32>
    %284 = vector.broadcast %36 : f32 to vector<2x384xf32>
    %285 = arith.mulf %127, %284 : vector<2x384xf32>
    %286 = vector.broadcast %37 : f32 to vector<2x384xf32>
    %287 = arith.mulf %179, %286 : vector<2x384xf32>
    %288 = arith.addf %285, %287 : vector<2x384xf32>
    %289 = vector.broadcast %38 : f32 to vector<2x384xf32>
    %290 = arith.mulf %231, %289 : vector<2x384xf32>
    %291 = arith.addf %288, %290 : vector<2x384xf32>
    %292 = vector.broadcast %39 : f32 to vector<2x384xf32>
    %293 = arith.mulf %283, %292 : vector<2x384xf32>
    %294 = arith.addf %291, %293 : vector<2x384xf32>
    %295 = vector.broadcast %68 : f32 to vector<2x384xf32>
    %296 = arith.addf %294, %295 : vector<2x384xf32>
    %cst = arith.constant 0.000000e+00 : f32
    %297 = vector.broadcast %cst : f32 to vector<2x384xf32>
    %298 = arith.maximumf %296, %297 : vector<2x384xf32>
    %c0_195 = arith.constant 0 : index
    %c0_196 = arith.constant 0 : index
    %c0_197 = arith.constant 0 : index
    %299 = vector.load %arg5[%c0_195, %c0_196, %c0_197] : memref<8x2x384xf32, #tpu.memory_space<vmem>>, vector<1x2x384xf32>
    %300 = vector.shape_cast %299 : vector<1x2x384xf32> to vector<2x384xf32>
    %301 = vector.shape_cast %298 : vector<2x384xf32> to vector<1x2x384xf32>
    tpu.vector_store %arg5[%c0_195, %c0_196, %c0_197], %301 {strides = array<i32>} : memref<8x2x384xf32, #tpu.memory_space<vmem>>, vector<1x2x384xf32>,
    %302 = vector.broadcast %40 : f32 to vector<2x384xf32>
    %303 = arith.mulf %127, %302 : vector<2x384xf32>
    %304 = vector.broadcast %41 : f32 to vector<2x384xf32>
    %305 = arith.mulf %179, %304 : vector<2x384xf32>
    %306 = arith.addf %303, %305 : vector<2x384xf32>
    %307 = vector.broadcast %42 : f32 to vector<2x384xf32>
    %308 = arith.mulf %231, %307 : vector<2x384xf32>
    %309 = arith.addf %306, %308 : vector<2x384xf32>
    %310 = vector.broadcast %43 : f32 to vector<2x384xf32>
    %311 = arith.mulf %283, %310 : vector<2x384xf32>
    %312 = arith.addf %309, %311 : vector<2x384xf32>
    %313 = vector.broadcast %69 : f32 to vector<2x384xf32>
    %314 = arith.addf %312, %313 : vector<2x384xf32>
    %cst_198 = arith.constant 0.000000e+00 : f32
    %315 = vector.broadcast %cst_198 : f32 to vector<2x384xf32>
    %316 = arith.maximumf %314, %315 : vector<2x384xf32>
    %c1_199 = arith.constant 1 : index
    %c0_200 = arith.constant 0 : index
    %c0_201 = arith.constant 0 : index
    %317 = vector.load %arg5[%c1_199, %c0_200, %c0_201] : memref<8x2x384xf32, #tpu.memory_space<vmem>>, vector<1x2x384xf32>
    %318 = vector.shape_cast %317 : vector<1x2x384xf32> to vector<2x384xf32>
    %319 = vector.shape_cast %316 : vector<2x384xf32> to vector<1x2x384xf32>
    tpu.vector_store %arg5[%c1_199, %c0_200, %c0_201], %319 {strides = array<i32>} : memref<8x2x384xf32, #tpu.memory_space<vmem>>, vector<1x2x384xf32>,
    %320 = vector.broadcast %44 : f32 to vector<2x384xf32>
    %321 = arith.mulf %127, %320 : vector<2x384xf32>
    %322 = vector.broadcast %45 : f32 to vector<2x384xf32>
    %323 = arith.mulf %179, %322 : vector<2x384xf32>
    %324 = arith.addf %321, %323 : vector<2x384xf32>
    %325 = vector.broadcast %46 : f32 to vector<2x384xf32>
    %326 = arith.mulf %231, %325 : vector<2x384xf32>
    %327 = arith.addf %324, %326 : vector<2x384xf32>
    %328 = vector.broadcast %47 : f32 to vector<2x384xf32>
    %329 = arith.mulf %283, %328 : vector<2x384xf32>
    %330 = arith.addf %327, %329 : vector<2x384xf32>
    %331 = vector.broadcast %70 : f32 to vector<2x384xf32>
    %332 = arith.addf %330, %331 : vector<2x384xf32>
    %cst_202 = arith.constant 0.000000e+00 : f32
    %333 = vector.broadcast %cst_202 : f32 to vector<2x384xf32>
    %334 = arith.maximumf %332, %333 : vector<2x384xf32>
    %c2_203 = arith.constant 2 : index
    %c0_204 = arith.constant 0 : index
    %c0_205 = arith.constant 0 : index
    %335 = vector.load %arg5[%c2_203, %c0_204, %c0_205] : memref<8x2x384xf32, #tpu.memory_space<vmem>>, vector<1x2x384xf32>
    %336 = vector.shape_cast %335 : vector<1x2x384xf32> to vector<2x384xf32>
    %337 = vector.shape_cast %334 : vector<2x384xf32> to vector<1x2x384xf32>
    tpu.vector_store %arg5[%c2_203, %c0_204, %c0_205], %337 {strides = array<i32>} : memref<8x2x384xf32, #tpu.memory_space<vmem>>, vector<1x2x384xf32>,
    %338 = vector.broadcast %48 : f32 to vector<2x384xf32>
    %339 = arith.mulf %127, %338 : vector<2x384xf32>
    %340 = vector.broadcast %49 : f32 to vector<2x384xf32>
    %341 = arith.mulf %179, %340 : vector<2x384xf32>
    %342 = arith.addf %339, %341 : vector<2x384xf32>
    %343 = vector.broadcast %50 : f32 to vector<2x384xf32>
    %344 = arith.mulf %231, %343 : vector<2x384xf32>
    %345 = arith.addf %342, %344 : vector<2x384xf32>
    %346 = vector.broadcast %51 : f32 to vector<2x384xf32>
    %347 = arith.mulf %283, %346 : vector<2x384xf32>
    %348 = arith.addf %345, %347 : vector<2x384xf32>
    %349 = vector.broadcast %71 : f32 to vector<2x384xf32>
    %350 = arith.addf %348, %349 : vector<2x384xf32>
    %cst_206 = arith.constant 0.000000e+00 : f32
    %351 = vector.broadcast %cst_206 : f32 to vector<2x384xf32>
    %352 = arith.maximumf %350, %351 : vector<2x384xf32>
    %c3_207 = arith.constant 3 : index
    %c0_208 = arith.constant 0 : index
    %c0_209 = arith.constant 0 : index
    %353 = vector.load %arg5[%c3_207, %c0_208, %c0_209] : memref<8x2x384xf32, #tpu.memory_space<vmem>>, vector<1x2x384xf32>
    %354 = vector.shape_cast %353 : vector<1x2x384xf32> to vector<2x384xf32>
    %355 = vector.shape_cast %352 : vector<2x384xf32> to vector<1x2x384xf32>
    tpu.vector_store %arg5[%c3_207, %c0_208, %c0_209], %355 {strides = array<i32>} : memref<8x2x384xf32, #tpu.memory_space<vmem>>, vector<1x2x384xf32>,
    %356 = vector.broadcast %52 : f32 to vector<2x384xf32>
    %357 = arith.mulf %127, %356 : vector<2x384xf32>
    %358 = vector.broadcast %53 : f32 to vector<2x384xf32>
    %359 = arith.mulf %179, %358 : vector<2x384xf32>
    %360 = arith.addf %357, %359 : vector<2x384xf32>
    %361 = vector.broadcast %54 : f32 to vector<2x384xf32>
    %362 = arith.mulf %231, %361 : vector<2x384xf32>
    %363 = arith.addf %360, %362 : vector<2x384xf32>
    %364 = vector.broadcast %55 : f32 to vector<2x384xf32>
    %365 = arith.mulf %283, %364 : vector<2x384xf32>
    %366 = arith.addf %363, %365 : vector<2x384xf32>
    %367 = vector.broadcast %72 : f32 to vector<2x384xf32>
    %368 = arith.addf %366, %367 : vector<2x384xf32>
    %cst_210 = arith.constant 0.000000e+00 : f32
    %369 = vector.broadcast %cst_210 : f32 to vector<2x384xf32>
    %370 = arith.maximumf %368, %369 : vector<2x384xf32>
    %c4_211 = arith.constant 4 : index
    %c0_212 = arith.constant 0 : index
    %c0_213 = arith.constant 0 : index
    %371 = vector.load %arg5[%c4_211, %c0_212, %c0_213] : memref<8x2x384xf32, #tpu.memory_space<vmem>>, vector<1x2x384xf32>
    %372 = vector.shape_cast %371 : vector<1x2x384xf32> to vector<2x384xf32>
    %373 = vector.shape_cast %370 : vector<2x384xf32> to vector<1x2x384xf32>
    tpu.vector_store %arg5[%c4_211, %c0_212, %c0_213], %373 {strides = array<i32>} : memref<8x2x384xf32, #tpu.memory_space<vmem>>, vector<1x2x384xf32>,
    %374 = vector.broadcast %56 : f32 to vector<2x384xf32>
    %375 = arith.mulf %127, %374 : vector<2x384xf32>
    %376 = vector.broadcast %57 : f32 to vector<2x384xf32>
    %377 = arith.mulf %179, %376 : vector<2x384xf32>
    %378 = arith.addf %375, %377 : vector<2x384xf32>
    %379 = vector.broadcast %58 : f32 to vector<2x384xf32>
    %380 = arith.mulf %231, %379 : vector<2x384xf32>
    %381 = arith.addf %378, %380 : vector<2x384xf32>
    %382 = vector.broadcast %59 : f32 to vector<2x384xf32>
    %383 = arith.mulf %283, %382 : vector<2x384xf32>
    %384 = arith.addf %381, %383 : vector<2x384xf32>
    %385 = vector.broadcast %73 : f32 to vector<2x384xf32>
    %386 = arith.addf %384, %385 : vector<2x384xf32>
    %cst_214 = arith.constant 0.000000e+00 : f32
    %387 = vector.broadcast %cst_214 : f32 to vector<2x384xf32>
    %388 = arith.maximumf %386, %387 : vector<2x384xf32>
    %c5_215 = arith.constant 5 : index
    %c0_216 = arith.constant 0 : index
    %c0_217 = arith.constant 0 : index
    %389 = vector.load %arg5[%c5_215, %c0_216, %c0_217] : memref<8x2x384xf32, #tpu.memory_space<vmem>>, vector<1x2x384xf32>
    %390 = vector.shape_cast %389 : vector<1x2x384xf32> to vector<2x384xf32>
    %391 = vector.shape_cast %388 : vector<2x384xf32> to vector<1x2x384xf32>
    tpu.vector_store %arg5[%c5_215, %c0_216, %c0_217], %391 {strides = array<i32>} : memref<8x2x384xf32, #tpu.memory_space<vmem>>, vector<1x2x384xf32>,
    %392 = vector.broadcast %60 : f32 to vector<2x384xf32>
    %393 = arith.mulf %127, %392 : vector<2x384xf32>
    %394 = vector.broadcast %61 : f32 to vector<2x384xf32>
    %395 = arith.mulf %179, %394 : vector<2x384xf32>
    %396 = arith.addf %393, %395 : vector<2x384xf32>
    %397 = vector.broadcast %62 : f32 to vector<2x384xf32>
    %398 = arith.mulf %231, %397 : vector<2x384xf32>
    %399 = arith.addf %396, %398 : vector<2x384xf32>
    %400 = vector.broadcast %63 : f32 to vector<2x384xf32>
    %401 = arith.mulf %283, %400 : vector<2x384xf32>
    %402 = arith.addf %399, %401 : vector<2x384xf32>
    %403 = vector.broadcast %74 : f32 to vector<2x384xf32>
    %404 = arith.addf %402, %403 : vector<2x384xf32>
    %cst_218 = arith.constant 0.000000e+00 : f32
    %405 = vector.broadcast %cst_218 : f32 to vector<2x384xf32>
    %406 = arith.maximumf %404, %405 : vector<2x384xf32>
    %c6_219 = arith.constant 6 : index
    %c0_220 = arith.constant 0 : index
    %c0_221 = arith.constant 0 : index
    %407 = vector.load %arg5[%c6_219, %c0_220, %c0_221] : memref<8x2x384xf32, #tpu.memory_space<vmem>>, vector<1x2x384xf32>
    %408 = vector.shape_cast %407 : vector<1x2x384xf32> to vector<2x384xf32>
    %409 = vector.shape_cast %406 : vector<2x384xf32> to vector<1x2x384xf32>
    tpu.vector_store %arg5[%c6_219, %c0_220, %c0_221], %409 {strides = array<i32>} : memref<8x2x384xf32, #tpu.memory_space<vmem>>, vector<1x2x384xf32>,
    %410 = vector.broadcast %64 : f32 to vector<2x384xf32>
    %411 = arith.mulf %127, %410 : vector<2x384xf32>
    %412 = vector.broadcast %65 : f32 to vector<2x384xf32>
    %413 = arith.mulf %179, %412 : vector<2x384xf32>
    %414 = arith.addf %411, %413 : vector<2x384xf32>
    %415 = vector.broadcast %66 : f32 to vector<2x384xf32>
    %416 = arith.mulf %231, %415 : vector<2x384xf32>
    %417 = arith.addf %414, %416 : vector<2x384xf32>
    %418 = vector.broadcast %67 : f32 to vector<2x384xf32>
    %419 = arith.mulf %283, %418 : vector<2x384xf32>
    %420 = arith.addf %417, %419 : vector<2x384xf32>
    %421 = vector.broadcast %75 : f32 to vector<2x384xf32>
    %422 = arith.addf %420, %421 : vector<2x384xf32>
    %cst_222 = arith.constant 0.000000e+00 : f32
    %423 = vector.broadcast %cst_222 : f32 to vector<2x384xf32>
    %424 = arith.maximumf %422, %423 : vector<2x384xf32>
    %c7_223 = arith.constant 7 : index
    %c0_224 = arith.constant 0 : index
    %c0_225 = arith.constant 0 : index
    %425 = vector.load %arg5[%c7_223, %c0_224, %c0_225] : memref<8x2x384xf32, #tpu.memory_space<vmem>>, vector<1x2x384xf32>
    %426 = vector.shape_cast %425 : vector<1x2x384xf32> to vector<2x384xf32>
    %427 = vector.shape_cast %424 : vector<2x384xf32> to vector<1x2x384xf32>
    tpu.vector_store %arg5[%c7_223, %c0_224, %c0_225], %427 {strides = array<i32>} : memref<8x2x384xf32, #tpu.memory_space<vmem>>, vector<1x2x384xf32>,
    return
  }
  func.func @transform_0(%arg0: i32) -> (i32, i32, i32) {
    %c0_i32 = arith.constant 0 : i32
    %c0_i32_0 = arith.constant 0 : i32
    %c0_i32_1 = arith.constant 0 : i32
    return %c0_i32, %arg0, %c0_i32_0 : i32, i32, i32
  }
  func.func @transform_1(%arg0: i32) -> (i32, i32) {
    %c0_i32 = arith.constant 0 : i32
    %c0_i32_0 = arith.constant 0 : i32
    %c0_i32_1 = arith.constant 0 : i32
    return %c0_i32, %c0_i32_0 : i32, i32
  }
  func.func @transform_2(%arg0: i32) -> (i32, i32) {
    %c0_i32 = arith.constant 0 : i32
    %c0_i32_0 = arith.constant 0 : i32
    %c0_i32_1 = arith.constant 0 : i32
    return %c0_i32, %c0_i32_0 : i32, i32
  }
  func.func @transform_3(%arg0: i32) -> i32 {
    %c0_i32 = arith.constant 0 : i32
    %c0_i32_0 = arith.constant 0 : i32
    return %c0_i32 : i32
  }
  func.func @transform_4(%arg0: i32) -> (i32, i32, i32) {
    %c0_i32 = arith.constant 0 : i32
    %c0_i32_0 = arith.constant 0 : i32
    %c0_i32_1 = arith.constant 0 : i32
    return %c0_i32, %arg0, %c0_i32_0 : i32, i32, i32
  }
}

</mosaic_0001>

<llo_original>
// kernel: tpu_custom_call.1
$region0: #{tpu_custom_call.1}
  #allocation0 [shape = 'u32[]', space=smem, size = 0x4, offset = 0x4, fixed_abs, tag = 'smem constant byte address 0x4 - core index']
  #allocation1 [shape = 'u32[144,128]{1,0:T(1,128)}', space=vmem, size = 0x12000, scoped, tag = 'internal scratch']
  %s0 = inlined_call_operand.hbm [shape: bf16[4,2,520], index: 0, kind: input, shape index: {}]
  %s1 = inlined_call_operand.vmem [shape: f32[4,9], index: 1, kind: input, shape index: {}]
  %s2 = inlined_call_operand.vmem [shape: f32[8,4], index: 2, kind: input, shape index: {}]
  %s3 = inlined_call_operand.vmem [shape: f32[8], index: 3, kind: input, shape index: {}]
  %s4 = inlined_call_operand.hbm [shape: f32[8,2,384], index: 4, kind: output, shape index: {}]
  %s5 = sld [smem:[#allocation0]]
  $region42: #{tpu_custom_call.1} parent=0
    _
  %s7 = ssub.s32 1, %s5
  %s8 = scalar_select 0, %s7, %s5
  $region1: #{tpu_custom_call.1} parent=0
    #allocation2 [shape = 'u8[10240]{0}', space=vmem, size = 0x2800, scoped, tag = 'input window, operand 0, single buffered']
    #allocation3 [shape = 's32[1]{0}', space=sflag, size = 0x4, scoped, tag = 'scoped memory for tpu_custom_call.1']
    #allocation4 [shape = 's32[1]{0}', space=sflag, size = 0x4, scoped, tag = 'scoped memory for tpu_custom_call.1']
    #allocation5 [shape = 's32[1]{0}', space=sflag, size = 0x4, scoped, tag = 'scoped memory for tpu_custom_call.1']
    #allocation6 [shape = 'u8[2048]{0}', space=smem, size = 0x800, scoped, tag = 'input window, operand 1, single buffered']
    #allocation7 [shape = 'u8[4096]{0}', space=smem, size = 0x1000, scoped, tag = 'input window, operand 2, single buffered']
    #allocation8 [shape = 's32[1]{0}', space=sflag, size = 0x4, scoped, tag = 'scoped memory for tpu_custom_call.1']
    #allocation9 [shape = 'u8[512]{0}', space=smem, size = 0x200, scoped, tag = 'input window, operand 3, single buffered']
    #allocation10 [shape = 'u8[24576]{0}', space=vmem, size = 0x6000, scoped, tag = 'output window, operand 0, single buffered']
    %9 = vsyncpa [#allocation3], 0
    %10 = vsyncpa [#allocation5], 0
    %11 = vsyncpa [#allocation8], 0
    %12 = vsyncpa [#allocation4], 0
    // Predicated region
    $region2: #{tpu_custom_call.1} parent=1 // pred_check
      _
    $region3: #{tpu_custom_call.1} parent=1 // pred_check_branch
      %14 = sbr.rel (0) target = $region5
    $region4: #{tpu_custom_call.1} parent=1 // pred_region
      %s16 = ssub.s32 320, 320
      %17 = vsyncadd [#allocation3], %s16
      %s18 = sshll.u32 [#allocation2], 4
      %s19 = int_to_ptr.vmem [resolvable:$true] %s18
      %24 = dma.hbm_to_vmem [thread:$0]  %s0, 320, %s19, [#allocation3], 80, 80, 5
    $region5: #{tpu_custom_call.1} parent=1 // pred_fallthru
      _
    // Predicated region
    $region6: #{tpu_custom_call.1} parent=1 // pred_check
      _
    $region7: #{tpu_custom_call.1} parent=1 // pred_check_branch
      %26 = sbr.rel (0) target = $region9
    $region8: #{tpu_custom_call.1} parent=1 // pred_region
      %s28 = ssub.s32 64, 64
      %29 = vsyncadd [#allocation5], %s28
      %s31 = sshll.u32 %s1, 4
      %s32 = int_to_ptr.vmem [resolvable:$true] %s31
      %34 = dma.vmem_to_smem %s32, 64, [#allocation6], [#allocation5]
    $region9: #{tpu_custom_call.1} parent=1 // pred_fallthru
      _
    // Predicated region
    $region10: #{tpu_custom_call.1} parent=1 // pred_check
      _
    $region11: #{tpu_custom_call.1} parent=1 // pred_check_branch
      %36 = sbr.rel (0) target = $region13
    $region12: #{tpu_custom_call.1} parent=1 // pred_region
      %s38 = ssub.s32 128, 128
      %39 = vsyncadd [#allocation8], %s38
      %s41 = sshll.u32 %s2, 4
      %s42 = int_to_ptr.vmem [resolvable:$true] %s41
      %44 = dma.vmem_to_smem %s42, 128, [#allocation7], [#allocation8]
    $region13: #{tpu_custom_call.1} parent=1 // pred_fallthru
      _
    // Predicated region
    $region14: #{tpu_custom_call.1} parent=1 // pred_check
      _
    $region15: #{tpu_custom_call.1} parent=1 // pred_check_branch
      %46 = sbr.rel (0) target = $region17
    $region16: #{tpu_custom_call.1} parent=1 // pred_region
      %s48 = ssub.s32 16, 16
      %49 = vsyncadd [#allocation8], %s48
      %s51 = sshll.u32 %s3, 4
      %s52 = int_to_ptr.vmem [resolvable:$true] %s51
      %54 = dma.vmem_to_smem %s52, 16, [#allocation9], [#allocation8]
    $region17: #{tpu_custom_call.1} parent=1 // pred_fallthru
      _
    // Predicated region
    $region18: #{tpu_custom_call.1} parent=1 // pred_check
      _
    $region19: #{tpu_custom_call.1} parent=1 // pred_check_branch
      %56 = sbr.rel (0) target = $region21
    $region20: #{tpu_custom_call.1} parent=1 // pred_region
      %57 = dma.done [#allocation3], 320
    $region21: #{tpu_custom_call.1} parent=1 // pred_fallthru
      _
    // Predicated region
    $region22: #{tpu_custom_call.1} parent=1 // pred_check
      _
    $region23: #{tpu_custom_call.1} parent=1 // pred_check_branch
      %59 = sbr.rel (0) target = $region25
    $region24: #{tpu_custom_call.1} parent=1 // pred_region
      %60 = dma.done [#allocation5], 64
    $region25: #{tpu_custom_call.1} parent=1 // pred_fallthru
      _
    // Predicated region
    $region26: #{tpu_custom_call.1} parent=1 // pred_check
      _
    $region27: #{tpu_custom_call.1} parent=1 // pred_check_branch
      %62 = sbr.rel (0) target = $region29
    $region28: #{tpu_custom_call.1} parent=1 // pred_region
      %63 = dma.done [#allocation8], 128
    $region29: #{tpu_custom_call.1} parent=1 // pred_fallthru
      _
    // Predicated region
    $region30: #{tpu_custom_call.1} parent=1 // pred_check
      _
    $region31: #{tpu_custom_call.1} parent=1 // pred_check_branch
      %65 = sbr.rel (0) target = $region33
    $region32: #{tpu_custom_call.1} parent=1 // pred_region
      %66 = dma.done [#allocation8], 16
    $region33: #{tpu_custom_call.1} parent=1 // pred_fallthru
      _
    %67 = sfence
    %s68 = sld [smem:[#allocation6]]
    %s69 = sld [smem:[#allocation6 + $0x1]]
    %s70 = sld [smem:[#allocation6 + $0x2]]
    %s71 = sld [smem:[#allocation6 + $0x3]]
    %s72 = sld [smem:[#allocation6 + $0x4]]
    %s73 = sld [smem:[#allocation6 + $0x5]]
    %s74 = sld [smem:[#allocation6 + $0x6]]
    %s75 = sld [smem:[#allocation6 + $0x7]]
    %s76 = sld [smem:[#allocation6 + $0x8]]
    %s77 = sld [smem:[#allocation6 + $0x80]]
    %s78 = sld [smem:[#allocation6 + $0x81]]
    %s79 = sld [smem:[#allocation6 + $0x82]]
    %s80 = sld [smem:[#allocation6 + $0x83]]
    %s81 = sld [smem:[#allocation6 + $0x84]]
    %s82 = sld [smem:[#allocation6 + $0x85]]
    %s83 = sld [smem:[#allocation6 + $0x86]]
    %s84 = sld [smem:[#allocation6 + $0x87]]
    %s85 = sld [smem:[#allocation6 + $0x88]]
    %s86 = sld [smem:[#allocation6 + $0x100]]
    %s87 = sld [smem:[#allocation6 + $0x101]]
    %s88 = sld [smem:[#allocation6 + $0x102]]
    %s89 = sld [smem:[#allocation6 + $0x103]]
    %s90 = sld [smem:[#allocation6 + $0x104]]
    %s91 = sld [smem:[#allocation6 + $0x105]]
    %s92 = sld [smem:[#allocation6 + $0x106]]
    %s93 = sld [smem:[#allocation6 + $0x107]]
    %s94 = sld [smem:[#allocation6 + $0x108]]
    %s95 = sld [smem:[#allocation6 + $0x180]]
    %s96 = sld [smem:[#allocation6 + $0x181]]
    %s97 = sld [smem:[#allocation6 + $0x182]]
    %s98 = sld [smem:[#allocation6 + $0x183]]
    %s99 = sld [smem:[#allocation6 + $0x184]]
    %s100 = sld [smem:[#allocation6 + $0x185]]
    %s101 = sld [smem:[#allocation6 + $0x186]]
    %s102 = sld [smem:[#allocation6 + $0x187]]
    %s103 = sld [smem:[#allocation6 + $0x188]]
    %s104 = sld [smem:[#allocation7]]
    %s105 = sld [smem:[#allocation7 + $0x1]]
    %s106 = sld [smem:[#allocation7 + $0x2]]
    %s107 = sld [smem:[#allocation7 + $0x3]]
    %s108 = sld [smem:[#allocation7 + $0x80]]
    %s109 = sld [smem:[#allocation7 + $0x81]]
    %s110 = sld [smem:[#allocation7 + $0x82]]
    %s111 = sld [smem:[#allocation7 + $0x83]]
    %s112 = sld [smem:[#allocation7 + $0x100]]
    %s113 = sld [smem:[#allocation7 + $0x101]]
    %s114 = sld [smem:[#allocation7 + $0x102]]
    %s115 = sld [smem:[#allocation7 + $0x103]]
    %s116 = sld [smem:[#allocation7 + $0x180]]
    %s117 = sld [smem:[#allocation7 + $0x181]]
    %s118 = sld [smem:[#allocation7 + $0x182]]
    %s119 = sld [smem:[#allocation7 + $0x183]]
    %s120 = sld [smem:[#allocation7 + $0x200]]
    %s121 = sld [smem:[#allocation7 + $0x201]]
    %s122 = sld [smem:[#allocation7 + $0x202]]
    %s123 = sld [smem:[#allocation7 + $0x203]]
    %s124 = sld [smem:[#allocation7 + $0x280]]
    %s125 = sld [smem:[#allocation7 + $0x281]]
    %s126 = sld [smem:[#allocation7 + $0x282]]
    %s127 = sld [smem:[#allocation7 + $0x283]]
    %s128 = sld [smem:[#allocation7 + $0x300]]
    %s129 = sld [smem:[#allocation7 + $0x301]]
    %s130 = sld [smem:[#allocation7 + $0x302]]
    %s131 = sld [smem:[#allocation7 + $0x303]]
    %s132 = sld [smem:[#allocation7 + $0x380]]
    %s133 = sld [smem:[#allocation7 + $0x381]]
    %s134 = sld [smem:[#allocation7 + $0x382]]
    %s135 = sld [smem:[#allocation7 + $0x383]]
    %s136 = sld [smem:[#allocation9]]
    %s137 = sld [smem:[#allocation9 + $0x1]]
    %s138 = sld [smem:[#allocation9 + $0x2]]
    %s139 = sld [smem:[#allocation9 + $0x3]]
    %s140 = sld [smem:[#allocation9 + $0x4]]
    %s141 = sld [smem:[#allocation9 + $0x5]]
    %s142 = sld [smem:[#allocation9 + $0x6]]
    %s143 = sld [smem:[#allocation9 + $0x7]]
    %v144 = vld [vmem:[#allocation2] sm:$0xf]
    %v145 = vunpack.c.l.bf16 %v144
    %v146 = vstv %s68
    %v147 = vmul.f32 %v145, %v146
    %v149 = vcombine.high %v145, %v145
    %v151 = vunpack.c.l.s4 1983009808
    %v152 = vunpack.c.0.s8 %v151
    %v153 = vlaneseq
    %v154 = vshrl.u32 %v153, 7
    %v155 = vsub.s32 %v152, %v154
    %v156 = vrot.slane %v145, %v155
    %v158 = vunpack.c.l.s4 1983009808
    %v159 = vunpack.c.0.s8 %v158
    %v160 = vlaneseq
    %v161 = vshrl.u32 %v160, 7
    %v162 = vsub.s32 %v159, %v161
    %v163 = vrot.slane %v149, %v162
    %v164 = vcombine.high %v156, %v156
    %v165 = vcombine.high %v163, %v163
    %170 = vrot.lane.b32.xlu0 %v156, 126
    %v171 = vpop.permute.xlu0 %170
    %172 = vrot.lane.b32.xlu0 %v164, 126
    %v173 = vpop.permute.xlu0 %172
    %174 = vrot.lane.b32.xlu0 %v163, 126
    %v175 = vpop.permute.xlu0 %174
    %176 = vrot.lane.b32.xlu0 %v165, 126
    %v177 = vpop.permute.xlu0 %176
    %v178 = vlaneseq
    %v179 = vand.u32 %v178, 127
    %vm180 = vcmp.lt.s32.totalorder %v179, 126
    %v181 = vsel %vm180, %v175, %v177
    %v182 = vsel %vm180, %v173, %v175
    %v183 = vsel %vm180, %v171, %v173
    %v184 = vstv %s69
    %v185 = vmul.f32 %v183, %v184
    %v186 = vmul.f32 %v182, %v184
    %v187 = vmul.f32 %v181, %v184
    %v191 = vcombine.low %v185, %v186
    %v193 = vunpack.c.l.s4 1983009808
    %v194 = vunpack.c.0.s8 %v193
    %v195 = vlaneseq
    %v196 = vshrl.u32 %v195, 7
    %v197 = vsub.s32 %v194, %v196
    %v198 = vrot.slane %v191, %v197
    %v200 = vunpack.c.l.s4 1983009808
    %v201 = vunpack.c.0.s8 %v200
    %v202 = vlaneseq
    %v203 = vshrl.u32 %v202, 7
    %v204 = vsub.s32 %v201, %v203
    %v205 = vrot.slane %v187, %v204
    %v206 = vcombine.low %v198, %v205
    %v208 = vadd.f32 %v147, %v206
    %209 = vrot.lane.b32.xlu0 %v156, 124
    %v210 = vpop.permute.xlu0 %209
    %211 = vrot.lane.b32.xlu0 %v164, 124
    %v212 = vpop.permute.xlu0 %211
    %213 = vrot.lane.b32.xlu0 %v163, 124
    %v214 = vpop.permute.xlu0 %213
    %215 = vrot.lane.b32.xlu0 %v165, 124
    %v216 = vpop.permute.xlu0 %215
    %vm217 = vcmp.lt.s32.totalorder %v179, 124
    %v218 = vsel %vm217, %v214, %v216
    %v219 = vsel %vm217, %v212, %v214
    %v220 = vsel %vm217, %v210, %v212
    %v221 = vstv %s70
    %v222 = vmul.f32 %v220, %v221
    %v223 = vmul.f32 %v219, %v221
    %v224 = vmul.f32 %v218, %v221
    %v228 = vcombine.low %v222, %v223
    %v230 = vunpack.c.l.s4 1983009808
    %v231 = vunpack.c.0.s8 %v230
    %v232 = vlaneseq
    %v233 = vshrl.u32 %v232, 7
    %v234 = vsub.s32 %v231, %v233
    %v235 = vrot.slane %v228, %v234
    %v237 = vunpack.c.l.s4 1983009808
    %v238 = vunpack.c.0.s8 %v237
    %v239 = vlaneseq
    %v240 = vshrl.u32 %v239, 7
    %v241 = vsub.s32 %v238, %v240
    %v242 = vrot.slane %v224, %v241
    %v243 = vcombine.low %v235, %v242
    %v245 = vadd.f32 %v208, %v243
    %246 = vrot.lane.b32.xlu0 %v156, 88
    %v247 = vpop.permute.xlu0 %246
    %248 = vrot.lane.b32.xlu0 %v164, 88
    %v249 = vpop.permute.xlu0 %248
    %250 = vrot.lane.b32.xlu0 %v163, 88
    %v251 = vpop.permute.xlu0 %250
    %252 = vrot.lane.b32.xlu0 %v165, 88
    %v253 = vpop.permute.xlu0 %252
    %vm254 = vcmp.lt.s32.totalorder %v179, 88
    %v255 = vsel %vm254, %v251, %v253
    %v256 = vsel %vm254, %v249, %v251
    %v257 = vsel %vm254, %v247, %v249
    %v258 = vstv %s71
    %v259 = vmul.f32 %v257, %v258
    %v260 = vmul.f32 %v256, %v258
    %v261 = vmul.f32 %v255, %v258
    %v265 = vcombine.low %v259, %v260
    %v267 = vunpack.c.l.s4 1983009808
    %v268 = vunpack.c.0.s8 %v267
    %v269 = vlaneseq
    %v270 = vshrl.u32 %v269, 7
    %v271 = vsub.s32 %v268, %v270
    %v272 = vrot.slane %v265, %v271
    %v274 = vunpack.c.l.s4 1983009808
    %v275 = vunpack.c.0.s8 %v274
    %v276 = vlaneseq
    %v277 = vshrl.u32 %v276, 7
    %v278 = vsub.s32 %v275, %v277
    %v279 = vrot.slane %v261, %v278
    %v280 = vcombine.low %v272, %v279
    %v282 = vadd.f32 %v245, %v280
    %283 = vrot.lane.b32.xlu0 %v156, 86
    %v284 = vpop.permute.xlu0 %283
    %285 = vrot.lane.b32.xlu0 %v164, 86
    %v286 = vpop.permute.xlu0 %285
    %287 = vrot.lane.b32.xlu0 %v163, 86
    %v288 = vpop.permute.xlu0 %287
    %289 = vrot.lane.b32.xlu0 %v165, 86
    %v290 = vpop.permute.xlu0 %289
    %vm291 = vcmp.lt.s32.totalorder %v179, 86
    %v292 = vsel %vm291, %v288, %v290
    %v293 = vsel %vm291, %v286, %v288
    %v294 = vsel %vm291, %v284, %v286
    %v295 = vstv %s72
    %v296 = vmul.f32 %v294, %v295
    %v297 = vmul.f32 %v293, %v295
    %v298 = vmul.f32 %v292, %v295
    %v302 = vcombine.low %v296, %v297
    %v304 = vunpack.c.l.s4 1983009808
    %v305 = vunpack.c.0.s8 %v304
    %v306 = vlaneseq
    %v307 = vshrl.u32 %v306, 7
    %v308 = vsub.s32 %v305, %v307
    %v309 = vrot.slane %v302, %v308
    %v311 = vunpack.c.l.s4 1983009808
    %v312 = vunpack.c.0.s8 %v311
    %v313 = vlaneseq
    %v314 = vshrl.u32 %v313, 7
    %v315 = vsub.s32 %v312, %v314
    %v316 = vrot.slane %v298, %v315
    %v317 = vcombine.low %v309, %v316
    %v319 = vadd.f32 %v282, %v317
    %320 = vrot.lane.b32.xlu0 %v156, 84
    %v321 = vpop.permute.xlu0 %320
    %322 = vrot.lane.b32.xlu0 %v164, 84
    %v323 = vpop.permute.xlu0 %322
    %324 = vrot.lane.b32.xlu0 %v163, 84
    %v325 = vpop.permute.xlu0 %324
    %326 = vrot.lane.b32.xlu0 %v165, 84
    %v327 = vpop.permute.xlu0 %326
    %vm328 = vcmp.lt.s32.totalorder %v179, 84
    %v329 = vsel %vm328, %v325, %v327
    %v330 = vsel %vm328, %v323, %v325
    %v331 = vsel %vm328, %v321, %v323
    %v332 = vstv %s73
    %v333 = vmul.f32 %v331, %v332
    %v334 = vmul.f32 %v330, %v332
    %v335 = vmul.f32 %v329, %v332
    %v339 = vcombine.low %v333, %v334
    %v341 = vunpack.c.l.s4 1983009808
    %v342 = vunpack.c.0.s8 %v341
    %v343 = vlaneseq
    %v344 = vshrl.u32 %v343, 7
    %v345 = vsub.s32 %v342, %v344
    %v346 = vrot.slane %v339, %v345
    %v348 = vunpack.c.l.s4 1983009808
    %v349 = vunpack.c.0.s8 %v348
    %v350 = vlaneseq
    %v351 = vshrl.u32 %v350, 7
    %v352 = vsub.s32 %v349, %v351
    %v353 = vrot.slane %v335, %v352
    %v354 = vcombine.low %v346, %v353
    %v356 = vadd.f32 %v319, %v354
    %357 = vrot.lane.b32.xlu0 %v156, 48
    %v358 = vpop.permute.xlu0 %357
    %359 = vrot.lane.b32.xlu0 %v164, 48
    %v360 = vpop.permute.xlu0 %359
    %361 = vrot.lane.b32.xlu0 %v163, 48
    %v362 = vpop.permute.xlu0 %361
    %363 = vrot.lane.b32.xlu0 %v165, 48
    %v364 = vpop.permute.xlu0 %363
    %vm365 = vcmp.lt.s32.totalorder %v179, 48
    %v366 = vsel %vm365, %v362, %v364
    %v367 = vsel %vm365, %v360, %v362
    %v368 = vsel %vm365, %v358, %v360
    %v369 = vstv %s74
    %v370 = vmul.f32 %v368, %v369
    %v371 = vmul.f32 %v367, %v369
    %v372 = vmul.f32 %v366, %v369
    %v376 = vcombine.low %v370, %v371
    %v378 = vunpack.c.l.s4 1983009808
    %v379 = vunpack.c.0.s8 %v378
    %v380 = vlaneseq
    %v381 = vshrl.u32 %v380, 7
    %v382 = vsub.s32 %v379, %v381
    %v383 = vrot.slane %v376, %v382
    %v385 = vunpack.c.l.s4 1983009808
    %v386 = vunpack.c.0.s8 %v385
    %v387 = vlaneseq
    %v388 = vshrl.u32 %v387, 7
    %v389 = vsub.s32 %v386, %v388
    %v390 = vrot.slane %v372, %v389
    %v391 = vcombine.low %v383, %v390
    %v393 = vadd.f32 %v356, %v391
    %394 = vrot.lane.b32.xlu0 %v156, 46
    %v395 = vpop.permute.xlu0 %394
    %396 = vrot.lane.b32.xlu0 %v164, 46
    %v397 = vpop.permute.xlu0 %396
    %398 = vrot.lane.b32.xlu0 %v163, 46
    %v399 = vpop.permute.xlu0 %398
    %400 = vrot.lane.b32.xlu0 %v165, 46
    %v401 = vpop.permute.xlu0 %400
    %vm402 = vcmp.lt.s32.totalorder %v179, 46
    %v403 = vsel %vm402, %v399, %v401
    %v404 = vsel %vm402, %v397, %v399
    %v405 = vsel %vm402, %v395, %v397
    %v406 = vstv %s75
    %v407 = vmul.f32 %v405, %v406
    %v408 = vmul.f32 %v404, %v406
    %v409 = vmul.f32 %v403, %v406
    %v413 = vcombine.low %v407, %v408
    %v415 = vunpack.c.l.s4 1983009808
    %v416 = vunpack.c.0.s8 %v415
    %v417 = vlaneseq
    %v418 = vshrl.u32 %v417, 7
    %v419 = vsub.s32 %v416, %v418
    %v420 = vrot.slane %v413, %v419
    %v422 = vunpack.c.l.s4 1983009808
    %v423 = vunpack.c.0.s8 %v422
    %v424 = vlaneseq
    %v425 = vshrl.u32 %v424, 7
    %v426 = vsub.s32 %v423, %v425
    %v427 = vrot.slane %v409, %v426
    %v428 = vcombine.low %v420, %v427
    %v430 = vadd.f32 %v393, %v428
    %431 = vrot.lane.b32.xlu0 %v156, 44
    %v432 = vpop.permute.xlu0 %431
    %433 = vrot.lane.b32.xlu0 %v164, 44
    %v434 = vpop.permute.xlu0 %433
    %435 = vrot.lane.b32.xlu0 %v163, 44
    %v436 = vpop.permute.xlu0 %435
    %437 = vrot.lane.b32.xlu0 %v165, 44
    %v438 = vpop.permute.xlu0 %437
    %vm439 = vcmp.lt.s32.totalorder %v179, 44
    %v440 = vsel %vm439, %v436, %v438
    %v441 = vsel %vm439, %v434, %v436
    %v442 = vsel %vm439, %v432, %v434
    %v443 = vstv %s76
    %v444 = vmul.f32 %v442, %v443
    %v445 = vmul.f32 %v441, %v443
    %v446 = vmul.f32 %v440, %v443
    %v450 = vcombine.low %v444, %v445
    %v452 = vunpack.c.l.s4 1983009808
    %v453 = vunpack.c.0.s8 %v452
    %v454 = vlaneseq
    %v455 = vshrl.u32 %v454, 7
    %v456 = vsub.s32 %v453, %v455
    %v457 = vrot.slane %v450, %v456
    %v459 = vunpack.c.l.s4 1983009808
    %v460 = vunpack.c.0.s8 %v459
    %v461 = vlaneseq
    %v462 = vshrl.u32 %v461, 7
    %v463 = vsub.s32 %v460, %v462
    %v464 = vrot.slane %v446, %v463
    %v465 = vcombine.low %v457, %v464
    %v467 = vadd.f32 %v430, %v465
    %s468 = scalar_lea.vmem [#allocation2], 5
    %v469 = vld [vmem:[%s468] sm:$0xf]
    %v470 = vunpack.c.l.bf16 %v469
    %v471 = vstv %s77
    %v472 = vmul.f32 %v470, %v471
    %v474 = vcombine.high %v470, %v470
    %v476 = vunpack.c.l.s4 1983009808
    %v477 = vunpack.c.0.s8 %v476
    %v478 = vlaneseq
    %v479 = vshrl.u32 %v478, 7
    %v480 = vsub.s32 %v477, %v479
    %v481 = vrot.slane %v470, %v480
    %v483 = vunpack.c.l.s4 1983009808
    %v484 = vunpack.c.0.s8 %v483
    %v485 = vlaneseq
    %v486 = vshrl.u32 %v485, 7
    %v487 = vsub.s32 %v484, %v486
    %v488 = vrot.slane %v474, %v487
    %v489 = vcombine.high %v481, %v481
    %v490 = vcombine.high %v488, %v488
    %495 = vrot.lane.b32.xlu0 %v481, 126
    %v496 = vpop.permute.xlu0 %495
    %497 = vrot.lane.b32.xlu0 %v489, 126
    %v498 = vpop.permute.xlu0 %497
    %499 = vrot.lane.b32.xlu0 %v488, 126
    %v500 = vpop.permute.xlu0 %499
    %501 = vrot.lane.b32.xlu0 %v490, 126
    %v502 = vpop.permute.xlu0 %501
    %v503 = vsel %vm180, %v500, %v502
    %v504 = vsel %vm180, %v498, %v500
    %v505 = vsel %vm180, %v496, %v498
    %v506 = vstv %s78
    %v507 = vmul.f32 %v505, %v506
    %v508 = vmul.f32 %v504, %v506
    %v509 = vmul.f32 %v503, %v506
    %v513 = vcombine.low %v507, %v508
    %v515 = vunpack.c.l.s4 1983009808
    %v516 = vunpack.c.0.s8 %v515
    %v517 = vlaneseq
    %v518 = vshrl.u32 %v517, 7
    %v519 = vsub.s32 %v516, %v518
    %v520 = vrot.slane %v513, %v519
    %v522 = vunpack.c.l.s4 1983009808
    %v523 = vunpack.c.0.s8 %v522
    %v524 = vlaneseq
    %v525 = vshrl.u32 %v524, 7
    %v526 = vsub.s32 %v523, %v525
    %v527 = vrot.slane %v509, %v526
    %v528 = vcombine.low %v520, %v527
    %v530 = vadd.f32 %v472, %v528
    %531 = vrot.lane.b32.xlu0 %v481, 124
    %v532 = vpop.permute.xlu0 %531
    %533 = vrot.lane.b32.xlu0 %v489, 124
    %v534 = vpop.permute.xlu0 %533
    %535 = vrot.lane.b32.xlu0 %v488, 124
    %v536 = vpop.permute.xlu0 %535
    %537 = vrot.lane.b32.xlu0 %v490, 124
    %v538 = vpop.permute.xlu0 %537
    %v539 = vsel %vm217, %v536, %v538
    %v540 = vsel %vm217, %v534, %v536
    %v541 = vsel %vm217, %v532, %v534
    %v542 = vstv %s79
    %v543 = vmul.f32 %v541, %v542
    %v544 = vmul.f32 %v540, %v542
    %v545 = vmul.f32 %v539, %v542
    %v549 = vcombine.low %v543, %v544
    %v551 = vunpack.c.l.s4 1983009808
    %v552 = vunpack.c.0.s8 %v551
    %v553 = vlaneseq
    %v554 = vshrl.u32 %v553, 7
    %v555 = vsub.s32 %v552, %v554
    %v556 = vrot.slane %v549, %v555
    %v558 = vunpack.c.l.s4 1983009808
    %v559 = vunpack.c.0.s8 %v558
    %v560 = vlaneseq
    %v561 = vshrl.u32 %v560, 7
    %v562 = vsub.s32 %v559, %v561
    %v563 = vrot.slane %v545, %v562
    %v564 = vcombine.low %v556, %v563
    %v566 = vadd.f32 %v530, %v564
    %567 = vrot.lane.b32.xlu0 %v481, 88
    %v568 = vpop.permute.xlu0 %567
    %569 = vrot.lane.b32.xlu0 %v489, 88
    %v570 = vpop.permute.xlu0 %569
    %571 = vrot.lane.b32.xlu0 %v488, 88
    %v572 = vpop.permute.xlu0 %571
    %573 = vrot.lane.b32.xlu0 %v490, 88
    %v574 = vpop.permute.xlu0 %573
    %v575 = vsel %vm254, %v572, %v574
    %v576 = vsel %vm254, %v570, %v572
    %v577 = vsel %vm254, %v568, %v570
    %v578 = vstv %s80
    %v579 = vmul.f32 %v577, %v578
    %v580 = vmul.f32 %v576, %v578
    %v581 = vmul.f32 %v575, %v578
    %v585 = vcombine.low %v579, %v580
    %v587 = vunpack.c.l.s4 1983009808
    %v588 = vunpack.c.0.s8 %v587
    %v589 = vlaneseq
    %v590 = vshrl.u32 %v589, 7
    %v591 = vsub.s32 %v588, %v590
    %v592 = vrot.slane %v585, %v591
    %v594 = vunpack.c.l.s4 1983009808
    %v595 = vunpack.c.0.s8 %v594
    %v596 = vlaneseq
    %v597 = vshrl.u32 %v596, 7
    %v598 = vsub.s32 %v595, %v597
    %v599 = vrot.slane %v581, %v598
    %v600 = vcombine.low %v592, %v599
    %v602 = vadd.f32 %v566, %v600
    %603 = vrot.lane.b32.xlu0 %v481, 86
    %v604 = vpop.permute.xlu0 %603
    %605 = vrot.lane.b32.xlu0 %v489, 86
    %v606 = vpop.permute.xlu0 %605
    %607 = vrot.lane.b32.xlu0 %v488, 86
    %v608 = vpop.permute.xlu0 %607
    %609 = vrot.lane.b32.xlu0 %v490, 86
    %v610 = vpop.permute.xlu0 %609
    %v611 = vsel %vm291, %v608, %v610
    %v612 = vsel %vm291, %v606, %v608
    %v613 = vsel %vm291, %v604, %v606
    %v614 = vstv %s81
    %v615 = vmul.f32 %v613, %v614
    %v616 = vmul.f32 %v612, %v614
    %v617 = vmul.f32 %v611, %v614
    %v621 = vcombine.low %v615, %v616
    %v623 = vunpack.c.l.s4 1983009808
    %v624 = vunpack.c.0.s8 %v623
    %v625 = vlaneseq
    %v626 = vshrl.u32 %v625, 7
    %v627 = vsub.s32 %v624, %v626
    %v628 = vrot.slane %v621, %v627
    %v630 = vunpack.c.l.s4 1983009808
    %v631 = vunpack.c.0.s8 %v630
    %v632 = vlaneseq
    %v633 = vshrl.u32 %v632, 7
    %v634 = vsub.s32 %v631, %v633
    %v635 = vrot.slane %v617, %v634
    %v636 = vcombine.low %v628, %v635
    %v638 = vadd.f32 %v602, %v636
    %639 = vrot.lane.b32.xlu0 %v481, 84
    %v640 = vpop.permute.xlu0 %639
    %641 = vrot.lane.b32.xlu0 %v489, 84
    %v642 = vpop.permute.xlu0 %641
    %643 = vrot.lane.b32.xlu0 %v488, 84
    %v644 = vpop.permute.xlu0 %643
    %645 = vrot.lane.b32.xlu0 %v490, 84
    %v646 = vpop.permute.xlu0 %645
    %v647 = vsel %vm328, %v644, %v646
    %v648 = vsel %vm328, %v642, %v644
    %v649 = vsel %vm328, %v640, %v642
    %v650 = vstv %s82
    %v651 = vmul.f32 %v649, %v650
    %v652 = vmul.f32 %v648, %v650
    %v653 = vmul.f32 %v647, %v650
    %v657 = vcombine.low %v651, %v652
    %v659 = vunpack.c.l.s4 1983009808
    %v660 = vunpack.c.0.s8 %v659
    %v661 = vlaneseq
    %v662 = vshrl.u32 %v661, 7
    %v663 = vsub.s32 %v660, %v662
    %v664 = vrot.slane %v657, %v663
    %v666 = vunpack.c.l.s4 1983009808
    %v667 = vunpack.c.0.s8 %v666
    %v668 = vlaneseq
    %v669 = vshrl.u32 %v668, 7
    %v670 = vsub.s32 %v667, %v669
    %v671 = vrot.slane %v653, %v670
    %v672 = vcombine.low %v664, %v671
    %v674 = vadd.f32 %v638, %v672
    %675 = vrot.lane.b32.xlu0 %v481, 48
    %v676 = vpop.permute.xlu0 %675
    %677 = vrot.lane.b32.xlu0 %v489, 48
    %v678 = vpop.permute.xlu0 %677
    %679 = vrot.lane.b32.xlu0 %v488, 48
    %v680 = vpop.permute.xlu0 %679
    %681 = vrot.lane.b32.xlu0 %v490, 48
    %v682 = vpop.permute.xlu0 %681
    %v683 = vsel %vm365, %v680, %v682
    %v684 = vsel %vm365, %v678, %v680
    %v685 = vsel %vm365, %v676, %v678
    %v686 = vstv %s83
    %v687 = vmul.f32 %v685, %v686
    %v688 = vmul.f32 %v684, %v686
    %v689 = vmul.f32 %v683, %v686
    %v693 = vcombine.low %v687, %v688
    %v695 = vunpack.c.l.s4 1983009808
    %v696 = vunpack.c.0.s8 %v695
    %v697 = vlaneseq
    %v698 = vshrl.u32 %v697, 7
    %v699 = vsub.s32 %v696, %v698
    %v700 = vrot.slane %v693, %v699
    %v702 = vunpack.c.l.s4 1983009808
    %v703 = vunpack.c.0.s8 %v702
    %v704 = vlaneseq
    %v705 = vshrl.u32 %v704, 7
    %v706 = vsub.s32 %v703, %v705
    %v707 = vrot.slane %v689, %v706
    %v708 = vcombine.low %v700, %v707
    %v710 = vadd.f32 %v674, %v708
    %711 = vrot.lane.b32.xlu0 %v481, 46
    %v712 = vpop.permute.xlu0 %711
    %713 = vrot.lane.b32.xlu0 %v489, 46
    %v714 = vpop.permute.xlu0 %713
    %715 = vrot.lane.b32.xlu0 %v488, 46
    %v716 = vpop.permute.xlu0 %715
    %717 = vrot.lane.b32.xlu0 %v490, 46
    %v718 = vpop.permute.xlu0 %717
    %v719 = vsel %vm402, %v716, %v718
    %v720 = vsel %vm402, %v714, %v716
    %v721 = vsel %vm402, %v712, %v714
    %v722 = vstv %s84
    %v723 = vmul.f32 %v721, %v722
    %v724 = vmul.f32 %v720, %v722
    %v725 = vmul.f32 %v719, %v722
    %v729 = vcombine.low %v723, %v724
    %v731 = vunpack.c.l.s4 1983009808
    %v732 = vunpack.c.0.s8 %v731
    %v733 = vlaneseq
    %v734 = vshrl.u32 %v733, 7
    %v735 = vsub.s32 %v732, %v734
    %v736 = vrot.slane %v729, %v735
    %v738 = vunpack.c.l.s4 1983009808
    %v739 = vunpack.c.0.s8 %v738
    %v740 = vlaneseq
    %v741 = vshrl.u32 %v740, 7
    %v742 = vsub.s32 %v739, %v741
    %v743 = vrot.slane %v725, %v742
    %v744 = vcombine.low %v736, %v743
    %v746 = vadd.f32 %v710, %v744
    %747 = vrot.lane.b32.xlu0 %v481, 44
    %v748 = vpop.permute.xlu0 %747
    %749 = vrot.lane.b32.xlu0 %v489, 44
    %v750 = vpop.permute.xlu0 %749
    %751 = vrot.lane.b32.xlu0 %v488, 44
    %v752 = vpop.permute.xlu0 %751
    %753 = vrot.lane.b32.xlu0 %v490, 44
    %v754 = vpop.permute.xlu0 %753
    %v755 = vsel %vm439, %v752, %v754
    %v756 = vsel %vm439, %v750, %v752
    %v757 = vsel %vm439, %v748, %v750
    %v758 = vstv %s85
    %v759 = vmul.f32 %v757, %v758
    %v760 = vmul.f32 %v756, %v758
    %v761 = vmul.f32 %v755, %v758
    %v765 = vcombine.low %v759, %v760
    %v767 = vunpack.c.l.s4 1983009808
    %v768 = vunpack.c.0.s8 %v767
    %v769 = vlaneseq
    %v770 = vshrl.u32 %v769, 7
    %v771 = vsub.s32 %v768, %v770
    %v772 = vrot.slane %v765, %v771
    %v774 = vunpack.c.l.s4 1983009808
    %v775 = vunpack.c.0.s8 %v774
    %v776 = vlaneseq
    %v777 = vshrl.u32 %v776, 7
    %v778 = vsub.s32 %v775, %v777
    %v779 = vrot.slane %v761, %v778
    %v780 = vcombine.low %v772, %v779
    %v782 = vadd.f32 %v746, %v780
    %s783 = scalar_lea.vmem [#allocation2], 10
    %v784 = vld [vmem:[%s783] sm:$0xf]
    %v785 = vunpack.c.l.bf16 %v784
    %v786 = vstv %s86
    %v787 = vmul.f32 %v785, %v786
    %v789 = vcombine.high %v785, %v785
    %v791 = vunpack.c.l.s4 1983009808
    %v792 = vunpack.c.0.s8 %v791
    %v793 = vlaneseq
    %v794 = vshrl.u32 %v793, 7
    %v795 = vsub.s32 %v792, %v794
    %v796 = vrot.slane %v785, %v795
    %v798 = vunpack.c.l.s4 1983009808
    %v799 = vunpack.c.0.s8 %v798
    %v800 = vlaneseq
    %v801 = vshrl.u32 %v800, 7
    %v802 = vsub.s32 %v799, %v801
    %v803 = vrot.slane %v789, %v802
    %v804 = vcombine.high %v796, %v796
    %v805 = vcombine.high %v803, %v803
    %810 = vrot.lane.b32.xlu0 %v796, 126
    %v811 = vpop.permute.xlu0 %810
    %812 = vrot.lane.b32.xlu0 %v804, 126
    %v813 = vpop.permute.xlu0 %812
    %814 = vrot.lane.b32.xlu0 %v803, 126
    %v815 = vpop.permute.xlu0 %814
    %816 = vrot.lane.b32.xlu0 %v805, 126
    %v817 = vpop.permute.xlu0 %816
    %v818 = vsel %vm180, %v815, %v817
    %v819 = vsel %vm180, %v813, %v815
    %v820 = vsel %vm180, %v811, %v813
    %v821 = vstv %s87
    %v822 = vmul.f32 %v820, %v821
    %v823 = vmul.f32 %v819, %v821
    %v824 = vmul.f32 %v818, %v821
    %v828 = vcombine.low %v822, %v823
    %v830 = vunpack.c.l.s4 1983009808
    %v831 = vunpack.c.0.s8 %v830
    %v832 = vlaneseq
    %v833 = vshrl.u32 %v832, 7
    %v834 = vsub.s32 %v831, %v833
    %v835 = vrot.slane %v828, %v834
    %v837 = vunpack.c.l.s4 1983009808
    %v838 = vunpack.c.0.s8 %v837
    %v839 = vlaneseq
    %v840 = vshrl.u32 %v839, 7
    %v841 = vsub.s32 %v838, %v840
    %v842 = vrot.slane %v824, %v841
    %v843 = vcombine.low %v835, %v842
    %v845 = vadd.f32 %v787, %v843
    %846 = vrot.lane.b32.xlu0 %v796, 124
    %v847 = vpop.permute.xlu0 %846
    %848 = vrot.lane.b32.xlu0 %v804, 124
    %v849 = vpop.permute.xlu0 %848
    %850 = vrot.lane.b32.xlu0 %v803, 124
    %v851 = vpop.permute.xlu0 %850
    %852 = vrot.lane.b32.xlu0 %v805, 124
    %v853 = vpop.permute.xlu0 %852
    %v854 = vsel %vm217, %v851, %v853
    %v855 = vsel %vm217, %v849, %v851
    %v856 = vsel %vm217, %v847, %v849
    %v857 = vstv %s88
    %v858 = vmul.f32 %v856, %v857
    %v859 = vmul.f32 %v855, %v857
    %v860 = vmul.f32 %v854, %v857
    %v864 = vcombine.low %v858, %v859
    %v866 = vunpack.c.l.s4 1983009808
    %v867 = vunpack.c.0.s8 %v866
    %v868 = vlaneseq
    %v869 = vshrl.u32 %v868, 7
    %v870 = vsub.s32 %v867, %v869
    %v871 = vrot.slane %v864, %v870
    %v873 = vunpack.c.l.s4 1983009808
    %v874 = vunpack.c.0.s8 %v873
    %v875 = vlaneseq
    %v876 = vshrl.u32 %v875, 7
    %v877 = vsub.s32 %v874, %v876
    %v878 = vrot.slane %v860, %v877
    %v879 = vcombine.low %v871, %v878
    %v881 = vadd.f32 %v845, %v879
    %882 = vrot.lane.b32.xlu0 %v796, 88
    %v883 = vpop.permute.xlu0 %882
    %884 = vrot.lane.b32.xlu0 %v804, 88
    %v885 = vpop.permute.xlu0 %884
    %886 = vrot.lane.b32.xlu0 %v803, 88
    %v887 = vpop.permute.xlu0 %886
    %888 = vrot.lane.b32.xlu0 %v805, 88
    %v889 = vpop.permute.xlu0 %888
    %v890 = vsel %vm254, %v887, %v889
    %v891 = vsel %vm254, %v885, %v887
    %v892 = vsel %vm254, %v883, %v885
    %v893 = vstv %s89
    %v894 = vmul.f32 %v892, %v893
    %v895 = vmul.f32 %v891, %v893
    %v896 = vmul.f32 %v890, %v893
    %v900 = vcombine.low %v894, %v895
    %v902 = vunpack.c.l.s4 1983009808
    %v903 = vunpack.c.0.s8 %v902
    %v904 = vlaneseq
    %v905 = vshrl.u32 %v904, 7
    %v906 = vsub.s32 %v903, %v905
    %v907 = vrot.slane %v900, %v906
    %v909 = vunpack.c.l.s4 1983009808
    %v910 = vunpack.c.0.s8 %v909
    %v911 = vlaneseq
    %v912 = vshrl.u32 %v911, 7
    %v913 = vsub.s32 %v910, %v912
    %v914 = vrot.slane %v896, %v913
    %v915 = vcombine.low %v907, %v914
    %v917 = vadd.f32 %v881, %v915
    %918 = vrot.lane.b32.xlu0 %v796, 86
    %v919 = vpop.permute.xlu0 %918
    %920 = vrot.lane.b32.xlu0 %v804, 86
    %v921 = vpop.permute.xlu0 %920
    %922 = vrot.lane.b32.xlu0 %v803, 86
    %v923 = vpop.permute.xlu0 %922
    %924 = vrot.lane.b32.xlu0 %v805, 86
    %v925 = vpop.permute.xlu0 %924
    %v926 = vsel %vm291, %v923, %v925
    %v927 = vsel %vm291, %v921, %v923
    %v928 = vsel %vm291, %v919, %v921
    %v929 = vstv %s90
    %v930 = vmul.f32 %v928, %v929
    %v931 = vmul.f32 %v927, %v929
    %v932 = vmul.f32 %v926, %v929
    %v936 = vcombine.low %v930, %v931
    %v938 = vunpack.c.l.s4 1983009808
    %v939 = vunpack.c.0.s8 %v938
    %v940 = vlaneseq
    %v941 = vshrl.u32 %v940, 7
    %v942 = vsub.s32 %v939, %v941
    %v943 = vrot.slane %v936, %v942
    %v945 = vunpack.c.l.s4 1983009808
    %v946 = vunpack.c.0.s8 %v945
    %v947 = vlaneseq
    %v948 = vshrl.u32 %v947, 7
    %v949 = vsub.s32 %v946, %v948
    %v950 = vrot.slane %v932, %v949
    %v951 = vcombine.low %v943, %v950
    %v953 = vadd.f32 %v917, %v951
    %954 = vrot.lane.b32.xlu0 %v796, 84
    %v955 = vpop.permute.xlu0 %954
    %956 = vrot.lane.b32.xlu0 %v804, 84
    %v957 = vpop.permute.xlu0 %956
    %958 = vrot.lane.b32.xlu0 %v803, 84
    %v959 = vpop.permute.xlu0 %958
    %960 = vrot.lane.b32.xlu0 %v805, 84
    %v961 = vpop.permute.xlu0 %960
    %v962 = vsel %vm328, %v959, %v961
    %v963 = vsel %vm328, %v957, %v959
    %v964 = vsel %vm328, %v955, %v957
    %v965 = vstv %s91
    %v966 = vmul.f32 %v964, %v965
    %v967 = vmul.f32 %v963, %v965
    %v968 = vmul.f32 %v962, %v965
    %v972 = vcombine.low %v966, %v967
    %v974 = vunpack.c.l.s4 1983009808
    %v975 = vunpack.c.0.s8 %v974
    %v976 = vlaneseq
    %v977 = vshrl.u32 %v976, 7
    %v978 = vsub.s32 %v975, %v977
    %v979 = vrot.slane %v972, %v978
    %v981 = vunpack.c.l.s4 1983009808
    %v982 = vunpack.c.0.s8 %v981
    %v983 = vlaneseq
    %v984 = vshrl.u32 %v983, 7
    %v985 = vsub.s32 %v982, %v984
    %v986 = vrot.slane %v968, %v985
    %v987 = vcombine.low %v979, %v986
    %v989 = vadd.f32 %v953, %v987
    %990 = vrot.lane.b32.xlu0 %v796, 48
    %v991 = vpop.permute.xlu0 %990
    %992 = vrot.lane.b32.xlu0 %v804, 48
    %v993 = vpop.permute.xlu0 %992
    %994 = vrot.lane.b32.xlu0 %v803, 48
    %v995 = vpop.permute.xlu0 %994
    %996 = vrot.lane.b32.xlu0 %v805, 48
    %v997 = vpop.permute.xlu0 %996
    %v998 = vsel %vm365, %v995, %v997
    %v999 = vsel %vm365, %v993, %v995
    %v1000 = vsel %vm365, %v991, %v993
    %v1001 = vstv %s92
    %v1002 = vmul.f32 %v1000, %v1001
    %v1003 = vmul.f32 %v999, %v1001
    %v1004 = vmul.f32 %v998, %v1001
    %v1008 = vcombine.low %v1002, %v1003
    %v1010 = vunpack.c.l.s4 1983009808
    %v1011 = vunpack.c.0.s8 %v1010
    %v1012 = vlaneseq
    %v1013 = vshrl.u32 %v1012, 7
    %v1014 = vsub.s32 %v1011, %v1013
    %v1015 = vrot.slane %v1008, %v1014
    %v1017 = vunpack.c.l.s4 1983009808
    %v1018 = vunpack.c.0.s8 %v1017
    %v1019 = vlaneseq
    %v1020 = vshrl.u32 %v1019, 7
    %v1021 = vsub.s32 %v1018, %v1020
    %v1022 = vrot.slane %v1004, %v1021
    %v1023 = vcombine.low %v1015, %v1022
    %v1025 = vadd.f32 %v989, %v1023
    %1026 = vrot.lane.b32.xlu0 %v796, 46
    %v1027 = vpop.permute.xlu0 %1026
    %1028 = vrot.lane.b32.xlu0 %v804, 46
    %v1029 = vpop.permute.xlu0 %1028
    %1030 = vrot.lane.b32.xlu0 %v803, 46
    %v1031 = vpop.permute.xlu0 %1030
    %1032 = vrot.lane.b32.xlu0 %v805, 46
    %v1033 = vpop.permute.xlu0 %1032
    %v1034 = vsel %vm402, %v1031, %v1033
    %v1035 = vsel %vm402, %v1029, %v1031
    %v1036 = vsel %vm402, %v1027, %v1029
    %v1037 = vstv %s93
    %v1038 = vmul.f32 %v1036, %v1037
    %v1039 = vmul.f32 %v1035, %v1037
    %v1040 = vmul.f32 %v1034, %v1037
    %v1044 = vcombine.low %v1038, %v1039
    %v1046 = vunpack.c.l.s4 1983009808
    %v1047 = vunpack.c.0.s8 %v1046
    %v1048 = vlaneseq
    %v1049 = vshrl.u32 %v1048, 7
    %v1050 = vsub.s32 %v1047, %v1049
    %v1051 = vrot.slane %v1044, %v1050
    %v1053 = vunpack.c.l.s4 1983009808
    %v1054 = vunpack.c.0.s8 %v1053
    %v1055 = vlaneseq
    %v1056 = vshrl.u32 %v1055, 7
    %v1057 = vsub.s32 %v1054, %v1056
    %v1058 = vrot.slane %v1040, %v1057
    %v1059 = vcombine.low %v1051, %v1058
    %v1061 = vadd.f32 %v1025, %v1059
    %1062 = vrot.lane.b32.xlu0 %v796, 44
    %v1063 = vpop.permute.xlu0 %1062
    %1064 = vrot.lane.b32.xlu0 %v804, 44
    %v1065 = vpop.permute.xlu0 %1064
    %1066 = vrot.lane.b32.xlu0 %v803, 44
    %v1067 = vpop.permute.xlu0 %1066
    %1068 = vrot.lane.b32.xlu0 %v805, 44
    %v1069 = vpop.permute.xlu0 %1068
    %v1070 = vsel %vm439, %v1067, %v1069
    %v1071 = vsel %vm439, %v1065, %v1067
    %v1072 = vsel %vm439, %v1063, %v1065
    %v1073 = vstv %s94
    %v1074 = vmul.f32 %v1072, %v1073
    %v1075 = vmul.f32 %v1071, %v1073
    %v1076 = vmul.f32 %v1070, %v1073
    %v1080 = vcombine.low %v1074, %v1075
    %v1082 = vunpack.c.l.s4 1983009808
    %v1083 = vunpack.c.0.s8 %v1082
    %v1084 = vlaneseq
    %v1085 = vshrl.u32 %v1084, 7
    %v1086 = vsub.s32 %v1083, %v1085
    %v1087 = vrot.slane %v1080, %v1086
    %v1089 = vunpack.c.l.s4 1983009808
    %v1090 = vunpack.c.0.s8 %v1089
    %v1091 = vlaneseq
    %v1092 = vshrl.u32 %v1091, 7
    %v1093 = vsub.s32 %v1090, %v1092
    %v1094 = vrot.slane %v1076, %v1093
    %v1095 = vcombine.low %v1087, %v1094
    %v1097 = vadd.f32 %v1061, %v1095
    %s1098 = scalar_lea.vmem [#allocation2], 15
    %v1099 = vld [vmem:[%s1098] sm:$0xf]
    %v1100 = vunpack.c.l.bf16 %v1099
    %v1101 = vstv %s95
    %v1102 = vmul.f32 %v1100, %v1101
    %v1104 = vcombine.high %v1100, %v1100
    %v1106 = vunpack.c.l.s4 1983009808
    %v1107 = vunpack.c.0.s8 %v1106
    %v1108 = vlaneseq
    %v1109 = vshrl.u32 %v1108, 7
    %v1110 = vsub.s32 %v1107, %v1109
    %v1111 = vrot.slane %v1100, %v1110
    %v1113 = vunpack.c.l.s4 1983009808
    %v1114 = vunpack.c.0.s8 %v1113
    %v1115 = vlaneseq
    %v1116 = vshrl.u32 %v1115, 7
    %v1117 = vsub.s32 %v1114, %v1116
    %v1118 = vrot.slane %v1104, %v1117
    %v1119 = vcombine.high %v1111, %v1111
    %v1120 = vcombine.high %v1118, %v1118
    %1125 = vrot.lane.b32.xlu0 %v1111, 126
    %v1126 = vpop.permute.xlu0 %1125
    %1127 = vrot.lane.b32.xlu0 %v1119, 126
    %v1128 = vpop.permute.xlu0 %1127
    %1129 = vrot.lane.b32.xlu0 %v1118, 126
    %v1130 = vpop.permute.xlu0 %1129
    %1131 = vrot.lane.b32.xlu0 %v1120, 126
    %v1132 = vpop.permute.xlu0 %1131
    %v1133 = vsel %vm180, %v1130, %v1132
    %v1134 = vsel %vm180, %v1128, %v1130
    %v1135 = vsel %vm180, %v1126, %v1128
    %v1136 = vstv %s96
    %v1137 = vmul.f32 %v1135, %v1136
    %v1138 = vmul.f32 %v1134, %v1136
    %v1139 = vmul.f32 %v1133, %v1136
    %v1143 = vcombine.low %v1137, %v1138
    %v1145 = vunpack.c.l.s4 1983009808
    %v1146 = vunpack.c.0.s8 %v1145
    %v1147 = vlaneseq
    %v1148 = vshrl.u32 %v1147, 7
    %v1149 = vsub.s32 %v1146, %v1148
    %v1150 = vrot.slane %v1143, %v1149
    %v1152 = vunpack.c.l.s4 1983009808
    %v1153 = vunpack.c.0.s8 %v1152
    %v1154 = vlaneseq
    %v1155 = vshrl.u32 %v1154, 7
    %v1156 = vsub.s32 %v1153, %v1155
    %v1157 = vrot.slane %v1139, %v1156
    %v1158 = vcombine.low %v1150, %v1157
    %v1160 = vadd.f32 %v1102, %v1158
    %1161 = vrot.lane.b32.xlu0 %v1111, 124
    %v1162 = vpop.permute.xlu0 %1161
    %1163 = vrot.lane.b32.xlu0 %v1119, 124
    %v1164 = vpop.permute.xlu0 %1163
    %1165 = vrot.lane.b32.xlu0 %v1118, 124
    %v1166 = vpop.permute.xlu0 %1165
    %1167 = vrot.lane.b32.xlu0 %v1120, 124
    %v1168 = vpop.permute.xlu0 %1167
    %v1169 = vsel %vm217, %v1166, %v1168
    %v1170 = vsel %vm217, %v1164, %v1166
    %v1171 = vsel %vm217, %v1162, %v1164
    %v1172 = vstv %s97
    %v1173 = vmul.f32 %v1171, %v1172
    %v1174 = vmul.f32 %v1170, %v1172
    %v1175 = vmul.f32 %v1169, %v1172
    %v1179 = vcombine.low %v1173, %v1174
    %v1181 = vunpack.c.l.s4 1983009808
    %v1182 = vunpack.c.0.s8 %v1181
    %v1183 = vlaneseq
    %v1184 = vshrl.u32 %v1183, 7
    %v1185 = vsub.s32 %v1182, %v1184
    %v1186 = vrot.slane %v1179, %v1185
    %v1188 = vunpack.c.l.s4 1983009808
    %v1189 = vunpack.c.0.s8 %v1188
    %v1190 = vlaneseq
    %v1191 = vshrl.u32 %v1190, 7
    %v1192 = vsub.s32 %v1189, %v1191
    %v1193 = vrot.slane %v1175, %v1192
    %v1194 = vcombine.low %v1186, %v1193
    %v1196 = vadd.f32 %v1160, %v1194
    %1197 = vrot.lane.b32.xlu0 %v1111, 88
    %v1198 = vpop.permute.xlu0 %1197
    %1199 = vrot.lane.b32.xlu0 %v1119, 88
    %v1200 = vpop.permute.xlu0 %1199
    %1201 = vrot.lane.b32.xlu0 %v1118, 88
    %v1202 = vpop.permute.xlu0 %1201
    %1203 = vrot.lane.b32.xlu0 %v1120, 88
    %v1204 = vpop.permute.xlu0 %1203
    %v1205 = vsel %vm254, %v1202, %v1204
    %v1206 = vsel %vm254, %v1200, %v1202
    %v1207 = vsel %vm254, %v1198, %v1200
    %v1208 = vstv %s98
    %v1209 = vmul.f32 %v1207, %v1208
    %v1210 = vmul.f32 %v1206, %v1208
    %v1211 = vmul.f32 %v1205, %v1208
    %v1215 = vcombine.low %v1209, %v1210
    %v1217 = vunpack.c.l.s4 1983009808
    %v1218 = vunpack.c.0.s8 %v1217
    %v1219 = vlaneseq
    %v1220 = vshrl.u32 %v1219, 7
    %v1221 = vsub.s32 %v1218, %v1220
    %v1222 = vrot.slane %v1215, %v1221
    %v1224 = vunpack.c.l.s4 1983009808
    %v1225 = vunpack.c.0.s8 %v1224
    %v1226 = vlaneseq
    %v1227 = vshrl.u32 %v1226, 7
    %v1228 = vsub.s32 %v1225, %v1227
    %v1229 = vrot.slane %v1211, %v1228
    %v1230 = vcombine.low %v1222, %v1229
    %v1232 = vadd.f32 %v1196, %v1230
    %1233 = vrot.lane.b32.xlu0 %v1111, 86
    %v1234 = vpop.permute.xlu0 %1233
    %1235 = vrot.lane.b32.xlu0 %v1119, 86
    %v1236 = vpop.permute.xlu0 %1235
    %1237 = vrot.lane.b32.xlu0 %v1118, 86
    %v1238 = vpop.permute.xlu0 %1237
    %1239 = vrot.lane.b32.xlu0 %v1120, 86
    %v1240 = vpop.permute.xlu0 %1239
    %v1241 = vsel %vm291, %v1238, %v1240
    %v1242 = vsel %vm291, %v1236, %v1238
    %v1243 = vsel %vm291, %v1234, %v1236
    %v1244 = vstv %s99
    %v1245 = vmul.f32 %v1243, %v1244
    %v1246 = vmul.f32 %v1242, %v1244
    %v1247 = vmul.f32 %v1241, %v1244
    %v1251 = vcombine.low %v1245, %v1246
    %v1253 = vunpack.c.l.s4 1983009808
    %v1254 = vunpack.c.0.s8 %v1253
    %v1255 = vlaneseq
    %v1256 = vshrl.u32 %v1255, 7
    %v1257 = vsub.s32 %v1254, %v1256
    %v1258 = vrot.slane %v1251, %v1257
    %v1260 = vunpack.c.l.s4 1983009808
    %v1261 = vunpack.c.0.s8 %v1260
    %v1262 = vlaneseq
    %v1263 = vshrl.u32 %v1262, 7
    %v1264 = vsub.s32 %v1261, %v1263
    %v1265 = vrot.slane %v1247, %v1264
    %v1266 = vcombine.low %v1258, %v1265
    %v1268 = vadd.f32 %v1232, %v1266
    %1269 = vrot.lane.b32.xlu0 %v1111, 84
    %v1270 = vpop.permute.xlu0 %1269
    %1271 = vrot.lane.b32.xlu0 %v1119, 84
    %v1272 = vpop.permute.xlu0 %1271
    %1273 = vrot.lane.b32.xlu0 %v1118, 84
    %v1274 = vpop.permute.xlu0 %1273
    %1275 = vrot.lane.b32.xlu0 %v1120, 84
    %v1276 = vpop.permute.xlu0 %1275
    %v1277 = vsel %vm328, %v1274, %v1276
    %v1278 = vsel %vm328, %v1272, %v1274
    %v1279 = vsel %vm328, %v1270, %v1272
    %v1280 = vstv %s100
    %v1281 = vmul.f32 %v1279, %v1280
    %v1282 = vmul.f32 %v1278, %v1280
    %v1283 = vmul.f32 %v1277, %v1280
    %v1287 = vcombine.low %v1281, %v1282
    %v1289 = vunpack.c.l.s4 1983009808
    %v1290 = vunpack.c.0.s8 %v1289
    %v1291 = vlaneseq
    %v1292 = vshrl.u32 %v1291, 7
    %v1293 = vsub.s32 %v1290, %v1292
    %v1294 = vrot.slane %v1287, %v1293
    %v1296 = vunpack.c.l.s4 1983009808
    %v1297 = vunpack.c.0.s8 %v1296
    %v1298 = vlaneseq
    %v1299 = vshrl.u32 %v1298, 7
    %v1300 = vsub.s32 %v1297, %v1299
    %v1301 = vrot.slane %v1283, %v1300
    %v1302 = vcombine.low %v1294, %v1301
    %v1304 = vadd.f32 %v1268, %v1302
    %1305 = vrot.lane.b32.xlu0 %v1111, 48
    %v1306 = vpop.permute.xlu0 %1305
    %1307 = vrot.lane.b32.xlu0 %v1119, 48
    %v1308 = vpop.permute.xlu0 %1307
    %1309 = vrot.lane.b32.xlu0 %v1118, 48
    %v1310 = vpop.permute.xlu0 %1309
    %1311 = vrot.lane.b32.xlu0 %v1120, 48
    %v1312 = vpop.permute.xlu0 %1311
    %v1313 = vsel %vm365, %v1310, %v1312
    %v1314 = vsel %vm365, %v1308, %v1310
    %v1315 = vsel %vm365, %v1306, %v1308
    %v1316 = vstv %s101
    %v1317 = vmul.f32 %v1315, %v1316
    %v1318 = vmul.f32 %v1314, %v1316
    %v1319 = vmul.f32 %v1313, %v1316
    %v1323 = vcombine.low %v1317, %v1318
    %v1325 = vunpack.c.l.s4 1983009808
    %v1326 = vunpack.c.0.s8 %v1325
    %v1327 = vlaneseq
    %v1328 = vshrl.u32 %v1327, 7
    %v1329 = vsub.s32 %v1326, %v1328
    %v1330 = vrot.slane %v1323, %v1329
    %v1332 = vunpack.c.l.s4 1983009808
    %v1333 = vunpack.c.0.s8 %v1332
    %v1334 = vlaneseq
    %v1335 = vshrl.u32 %v1334, 7
    %v1336 = vsub.s32 %v1333, %v1335
    %v1337 = vrot.slane %v1319, %v1336
    %v1338 = vcombine.low %v1330, %v1337
    %v1340 = vadd.f32 %v1304, %v1338
    %1341 = vrot.lane.b32.xlu0 %v1111, 46
    %v1342 = vpop.permute.xlu0 %1341
    %1343 = vrot.lane.b32.xlu0 %v1119, 46
    %v1344 = vpop.permute.xlu0 %1343
    %1345 = vrot.lane.b32.xlu0 %v1118, 46
    %v1346 = vpop.permute.xlu0 %1345
    %1347 = vrot.lane.b32.xlu0 %v1120, 46
    %v1348 = vpop.permute.xlu0 %1347
    %v1349 = vsel %vm402, %v1346, %v1348
    %v1350 = vsel %vm402, %v1344, %v1346
    %v1351 = vsel %vm402, %v1342, %v1344
    %v1352 = vstv %s102
    %v1353 = vmul.f32 %v1351, %v1352
    %v1354 = vmul.f32 %v1350, %v1352
    %v1355 = vmul.f32 %v1349, %v1352
    %v1359 = vcombine.low %v1353, %v1354
    %v1361 = vunpack.c.l.s4 1983009808
    %v1362 = vunpack.c.0.s8 %v1361
    %v1363 = vlaneseq
    %v1364 = vshrl.u32 %v1363, 7
    %v1365 = vsub.s32 %v1362, %v1364
    %v1366 = vrot.slane %v1359, %v1365
    %v1368 = vunpack.c.l.s4 1983009808
    %v1369 = vunpack.c.0.s8 %v1368
    %v1370 = vlaneseq
    %v1371 = vshrl.u32 %v1370, 7
    %v1372 = vsub.s32 %v1369, %v1371
    %v1373 = vrot.slane %v1355, %v1372
    %v1374 = vcombine.low %v1366, %v1373
    %v1376 = vadd.f32 %v1340, %v1374
    %1377 = vrot.lane.b32.xlu0 %v1111, 44
    %v1378 = vpop.permute.xlu0 %1377
    %1379 = vrot.lane.b32.xlu0 %v1119, 44
    %v1380 = vpop.permute.xlu0 %1379
    %1381 = vrot.lane.b32.xlu0 %v1118, 44
    %v1382 = vpop.permute.xlu0 %1381
    %1383 = vrot.lane.b32.xlu0 %v1120, 44
    %v1384 = vpop.permute.xlu0 %1383
    %v1385 = vsel %vm439, %v1382, %v1384
    %v1386 = vsel %vm439, %v1380, %v1382
    %v1387 = vsel %vm439, %v1378, %v1380
    %v1388 = vstv %s103
    %v1389 = vmul.f32 %v1387, %v1388
    %v1390 = vmul.f32 %v1386, %v1388
    %v1391 = vmul.f32 %v1385, %v1388
    %v1395 = vcombine.low %v1389, %v1390
    %v1397 = vunpack.c.l.s4 1983009808
    %v1398 = vunpack.c.0.s8 %v1397
    %v1399 = vlaneseq
    %v1400 = vshrl.u32 %v1399, 7
    %v1401 = vsub.s32 %v1398, %v1400
    %v1402 = vrot.slane %v1395, %v1401
    %v1404 = vunpack.c.l.s4 1983009808
    %v1405 = vunpack.c.0.s8 %v1404
    %v1406 = vlaneseq
    %v1407 = vshrl.u32 %v1406, 7
    %v1408 = vsub.s32 %v1405, %v1407
    %v1409 = vrot.slane %v1391, %v1408
    %v1410 = vcombine.low %v1402, %v1409
    %v1412 = vadd.f32 %v1376, %v1410
    %v1413 = vstv %s104
    %v1414 = vmul.f32 %v467, %v1413
    %v1415 = vstv %s105
    %v1416 = vmul.f32 %v782, %v1415
    %v1417 = vadd.f32 %v1414, %v1416
    %v1418 = vstv %s106
    %v1419 = vmul.f32 %v1097, %v1418
    %v1420 = vadd.f32 %v1417, %v1419
    %v1421 = vstv %s107
    %v1422 = vmul.f32 %v1412, %v1421
    %v1423 = vadd.f32 %v1420, %v1422
    %v1424 = vstv %s136
    %v1425 = vadd.f32 %v1423, %v1424
    %v1426 = vmax.f32 %v1425, 0.0
    %1427 = vst [vmem:[#allocation10] sm:$0x3f] %v1426
    %v1428 = vstv %s108
    %v1429 = vmul.f32 %v467, %v1428
    %v1430 = vstv %s109
    %v1431 = vmul.f32 %v782, %v1430
    %v1432 = vadd.f32 %v1429, %v1431
    %v1433 = vstv %s110
    %v1434 = vmul.f32 %v1097, %v1433
    %v1435 = vadd.f32 %v1432, %v1434
    %v1436 = vstv %s111
    %v1437 = vmul.f32 %v1412, %v1436
    %v1438 = vadd.f32 %v1435, %v1437
    %v1439 = vstv %s137
    %v1440 = vadd.f32 %v1438, %v1439
    %v1441 = vmax.f32 %v1440, 0.0
    %s1442 = scalar_lea.vmem [#allocation10], 6
    %1443 = vst [vmem:[%s1442] sm:$0x3f] %v1441
    %v1444 = vstv %s112
    %v1445 = vmul.f32 %v467, %v1444
    %v1446 = vstv %s113
    %v1447 = vmul.f32 %v782, %v1446
    %v1448 = vadd.f32 %v1445, %v1447
    %v1449 = vstv %s114
    %v1450 = vmul.f32 %v1097, %v1449
    %v1451 = vadd.f32 %v1448, %v1450
    %v1452 = vstv %s115
    %v1453 = vmul.f32 %v1412, %v1452
    %v1454 = vadd.f32 %v1451, %v1453
    %v1455 = vstv %s138
    %v1456 = vadd.f32 %v1454, %v1455
    %v1457 = vmax.f32 %v1456, 0.0
    %s1458 = scalar_lea.vmem [#allocation10], 12
    %1459 = vst [vmem:[%s1458] sm:$0x3f] %v1457
    %v1460 = vstv %s116
    %v1461 = vmul.f32 %v467, %v1460
    %v1462 = vstv %s117
    %v1463 = vmul.f32 %v782, %v1462
    %v1464 = vadd.f32 %v1461, %v1463
    %v1465 = vstv %s118
    %v1466 = vmul.f32 %v1097, %v1465
    %v1467 = vadd.f32 %v1464, %v1466
    %v1468 = vstv %s119
    %v1469 = vmul.f32 %v1412, %v1468
    %v1470 = vadd.f32 %v1467, %v1469
    %v1471 = vstv %s139
    %v1472 = vadd.f32 %v1470, %v1471
    %v1473 = vmax.f32 %v1472, 0.0
    %s1474 = scalar_lea.vmem [#allocation10], 18
    %1475 = vst [vmem:[%s1474] sm:$0x3f] %v1473
    %v1476 = vstv %s120
    %v1477 = vmul.f32 %v467, %v1476
    %v1478 = vstv %s121
    %v1479 = vmul.f32 %v782, %v1478
    %v1480 = vadd.f32 %v1477, %v1479
    %v1481 = vstv %s122
    %v1482 = vmul.f32 %v1097, %v1481
    %v1483 = vadd.f32 %v1480, %v1482
    %v1484 = vstv %s123
    %v1485 = vmul.f32 %v1412, %v1484
    %v1486 = vadd.f32 %v1483, %v1485
    %v1487 = vstv %s140
    %v1488 = vadd.f32 %v1486, %v1487
    %v1489 = vmax.f32 %v1488, 0.0
    %s1490 = scalar_lea.vmem [#allocation10], 24
    %1491 = vst [vmem:[%s1490] sm:$0x3f] %v1489
    %v1492 = vstv %s124
    %v1493 = vmul.f32 %v467, %v1492
    %v1494 = vstv %s125
    %v1495 = vmul.f32 %v782, %v1494
    %v1496 = vadd.f32 %v1493, %v1495
    %v1497 = vstv %s126
    %v1498 = vmul.f32 %v1097, %v1497
    %v1499 = vadd.f32 %v1496, %v1498
    %v1500 = vstv %s127
    %v1501 = vmul.f32 %v1412, %v1500
    %v1502 = vadd.f32 %v1499, %v1501
    %v1503 = vstv %s141
    %v1504 = vadd.f32 %v1502, %v1503
    %v1505 = vmax.f32 %v1504, 0.0
    %s1506 = scalar_lea.vmem [#allocation10], 30
    %1507 = vst [vmem:[%s1506] sm:$0x3f] %v1505
    %v1508 = vstv %s128
    %v1509 = vmul.f32 %v467, %v1508
    %v1510 = vstv %s129
    %v1511 = vmul.f32 %v782, %v1510
    %v1512 = vadd.f32 %v1509, %v1511
    %v1513 = vstv %s130
    %v1514 = vmul.f32 %v1097, %v1513
    %v1515 = vadd.f32 %v1512, %v1514
    %v1516 = vstv %s131
    %v1517 = vmul.f32 %v1412, %v1516
    %v1518 = vadd.f32 %v1515, %v1517
    %v1519 = vstv %s142
    %v1520 = vadd.f32 %v1518, %v1519
    %v1521 = vmax.f32 %v1520, 0.0
    %s1522 = scalar_lea.vmem [#allocation10], 36
    %1523 = vst [vmem:[%s1522] sm:$0x3f] %v1521
    %v1524 = vstv %s132
    %v1525 = vmul.f32 %v467, %v1524
    %v1526 = vstv %s133
    %v1527 = vmul.f32 %v782, %v1526
    %v1528 = vadd.f32 %v1525, %v1527
    %v1529 = vstv %s134
    %v1530 = vmul.f32 %v1097, %v1529
    %v1531 = vadd.f32 %v1528, %v1530
    %v1532 = vstv %s135
    %v1533 = vmul.f32 %v1412, %v1532
    %v1534 = vadd.f32 %v1531, %v1533
    %v1535 = vstv %s143
    %v1536 = vadd.f32 %v1534, %v1535
    %v1537 = vmax.f32 %v1536, 0.0
    %s1538 = scalar_lea.vmem [#allocation10], 42
    %1539 = vst [vmem:[%s1538] sm:$0x3f] %v1537
    // Predicated region
    $region34: #{tpu_custom_call.1} parent=1 // pred_check
      _
    $region35: #{tpu_custom_call.1} parent=1 // pred_check_branch
      %1541 = sbr.rel (0) target = $region37
    $region36: #{tpu_custom_call.1} parent=1 // pred_region
      %s1543 = ssub.s32 768, 768
      %1544 = vsyncadd [#allocation4], %s1543
      %s1545 = sshll.u32 [#allocation10], 4
      %s1546 = int_to_ptr.vmem [resolvable:$true] %s1545
      %1551 = dma.vmem_to_hbm [thread:$0]  %s1546, 768, %s4, [#allocation4], 96, 96, 6
    $region37: #{tpu_custom_call.1} parent=1 // pred_fallthru
      _
    // Predicated region
    $region38: #{tpu_custom_call.1} parent=1 // pred_check
      _
    $region39: #{tpu_custom_call.1} parent=1 // pred_check_branch
      %1553 = sbr.rel (0) target = $region41
    $region40: #{tpu_custom_call.1} parent=1 // pred_region
      %1554 = dma.done [#allocation4], 768
    $region41: #{tpu_custom_call.1} parent=1 // pred_fallthru
      _
    %1555 = vsyncpa [#allocation3], 1
    %1556 = vsyncpa [#allocation4], 1
    %1557 = vsyncpa [#allocation5], 1
    %1558 = vsyncpa [#allocation8], 1

</llo_original>
